<compile_context>
chip_gen: v7x
topology: tpu7x:2x2x1
jax: 0.10.0
libtpu: 0.0.40
codegen_flags: <defaults>
</compile_context>

<pallas_src>
import jax
import jax.numpy as jnp
from jax.experimental import pallas as pl
from jax.experimental.pallas import tpu as pltpu

PARA_KER = [3, 5, 7]            # odd kernel sizes -> symmetric 'same' padding
KMAX = max(PARA_KER)            # 7; all branches share one padded buffer / one im2col
POOL = 6                        # MaxPool1d kernel (= stride)
B = 2                           # batch
L = 24                          # sequence length (divisible by POOL)
CIN = 4                         # one-hot DNA channels
COUT = 4                        # per-branch Conv1d output channels
BINODE = COUT * len(PARA_KER)   # 12 = lstm input / hidden / output size
H = BINODE                      # LSTM hidden size per direction
T = L // POOL                   # 4
FEAT = T * BINODE               # 48 = flattened feature size

# ---- packed weight-slab layout (row starts aligned to 8 sublanes, 128 lanes) ----------------
ROW_WCONV = 0      # (28, 12)  fused 3-branch conv weight (im2col layout)
ROW_WIH   = 32     # (12, 96)  LSTM input->gates, both directions, interleaved gate columns
ROW_WHH   = 48     # (24, 96)  block-diagonal hidden->gates, both directions
ROW_WH1   = 72     # (96, 48)  (output Linear ∘ Flatten ∘ fc[0]) folded weight
ROW_W2D   = 168    # (48, 1)   fc[2] logit-difference column
ROW_BCONV = 216    # (1, 12)
ROW_BG    = 217    # (1, 96)
ROW_BH1   = 218    # (1, 48)
ROW_B2D   = 219    # (1, 1)
SLAB_ROWS = 224
SLAB_COLS = 128

_VMEM = pl.BlockSpec(memory_space=pltpu.MemorySpace.VMEM)


def _sigmoid(x):
    # exp + approximate reciprocal both execute on the EUP slot, leaving VALU slots free.
    return pl.reciprocal(1.0 + jnp.exp(-x), approx=True)


def deepromoter_kernel(xcol_ref, w_ref, o_ref):
    # ---------------- ParallelCNN: 3x (Conv1d 'same' + ReLU + MaxPool1d) as ONE matmul.
    # xcol (built in the wrapper): row (b, l) = [xp[b,l+0,:], ..., xp[b,l+KMAX-1,:]]  (B*L, 28)
    wconv = w_ref[ROW_WCONV:ROW_WCONV + KMAX * CIN, 0:BINODE]           # (28, 12)
    bconv = w_ref[ROW_BCONV:ROW_BCONV + 1, 0:BINODE]                    # (1, 12)
    acc = jnp.dot(xcol_ref[...], wconv, preferred_element_type=jnp.float32) + bconv
    y = jnp.maximum(acc, 0.0).reshape(B, T, POOL, BINODE)
    feat = jnp.max(y, axis=2)                                           # (B, T, 12) all branches

    # ---------------- BiLSTM.
    # Input projection hoisted out of the recurrence: one matmul covers every timestep and BOTH
    # directions (gate columns interleaved as [i_f i_b | f_f f_b | g_f g_b | o_f o_b], 12 each).
    wih = w_ref[ROW_WIH:ROW_WIH + H, 0:8 * H]                           # (12, 96)
    bg = w_ref[ROW_BG:ROW_BG + 1, 0:8 * H]                              # (1, 96)  b_ih + b_hh
    xproj = (jnp.dot(feat.reshape(B * T, H), wih, preferred_element_type=jnp.float32)
             + bg).reshape(B, T, 8 * H)                                 # (B, T, 96)

    # Fused fwd+bwd recurrence: h/c carried as [fwd | bwd] (B, 24); ONE MXU push per step.
    whh = w_ref[ROW_WHH:ROW_WHH + 2 * H, 0:8 * H]                       # (24, 96) block-diagonal
    col = jax.lax.broadcasted_iota(jnp.int32, (1, 8 * H), 1)
    fwd_col = (col % (2 * H)) < H                                       # static fwd/bwd col mask

    h = jnp.zeros((B, 2 * H), jnp.float32)
    c = jnp.zeros((B, 2 * H), jnp.float32)
    hf = [None] * T
    hb = [None] * T
    for step in range(T):                                               # T = 4: static full unroll
        tf = step                                                       # forward time index
        tb = T - 1 - step                                               # backward time index
        x_cat = jnp.where(fwd_col, xproj[:, tf, :], xproj[:, tb, :])    # (B, 96)
        pre = jnp.dot(h, whh, preferred_element_type=jnp.float32) + x_cat
        i_g = _sigmoid(pre[:, 0 * 2 * H:1 * 2 * H])                     # (B, 24) both directions
        f_g = _sigmoid(pre[:, 1 * 2 * H:2 * 2 * H])
        g_g = jnp.tanh(pre[:, 2 * 2 * H:3 * 2 * H])
        o_g = _sigmoid(pre[:, 3 * 2 * H:4 * 2 * H])
        c = f_g * c + i_g * g_g
        h = o_g * jnp.tanh(c)                                           # (B, 24) = [h_f(tf)|h_b(tb)]
        hf[tf] = h[:, 0:H]
        hb[tb] = h[:, H:2 * H]

    # ---------------- Output Linear + Flatten + fc[0] folded into ONE matmul (host-side fold).
    h_all = jnp.concatenate([piece for t in range(T) for piece in (hf[t], hb[t])],
                            axis=-1)                                    # (B, T*2H) = (B, 96)
    w_h1 = w_ref[ROW_WH1:ROW_WH1 + T * 2 * H, 0:FEAT]                   # (96, 48)
    b_h1 = w_ref[ROW_BH1:ROW_BH1 + 1, 0:FEAT]                           # (1, 48)
    h1 = jnp.maximum(jnp.dot(h_all, w_h1, preferred_element_type=jnp.float32) + b_h1, 0.0)

    # ---------------- fc[2] + Softmax(dim=1): softmax over 2 classes == [1-sigmoid(d), sigmoid(d)]
    # with d = logit1 - logit0 (folded into a single weight column on the host). No XLU reductions.
    w2d = w_ref[ROW_W2D:ROW_W2D + FEAT, 0:1]                            # (48, 1)
    b2d = w_ref[ROW_B2D:ROW_B2D + 1, 0:1]                               # (1, 1)
    d = jnp.dot(h1, w2d, preferred_element_type=jnp.float32) + b2d      # (B, 1)
    p1 = 1.0 / (1.0 + jnp.exp(-d))                                      # exact sigmoid for output
    o_ref[...] = jnp.concatenate([1.0 - p1, p1], axis=-1)               # (B, 2), rows sum to 1


# ---------------- Parameter init (deterministic, synthetic) in PyTorch layouts.
def init_params(key):
    """Synthetic parameters kept in torch layouts so pack_params documents the exact mapping."""
    def nrm(k, shape, scale=0.1):
        return scale * jax.random.normal(k, shape, jnp.float32)

    keys = iter(jax.random.split(key, 32))
    p = {}
    for bi, k_sz in enumerate(PARA_KER):
        p[f"conv_w{bi}"] = nrm(next(keys), (COUT, CIN, k_sz))           # Conv1d.weight
        p[f"conv_b{bi}"] = nrm(next(keys), (COUT,))
    for dname in ("f", "b"):                                            # LSTM l0 / l0_reverse
        p[f"w_ih_{dname}"] = nrm(next(keys), (4 * H, H))                # gate rows [i|f|g|o]
        p[f"w_hh_{dname}"] = nrm(next(keys), (4 * H, H))
        p[f"b_ih_{dname}"] = nrm(next(keys), (4 * H,))
        p[f"b_hh_{dname}"] = nrm(next(keys), (4 * H,))
    p["w_lin"] = nrm(next(keys), (BINODE, 2 * H))                       # BidirectionalLSTM.linear
    p["b_lin"] = nrm(next(keys), (BINODE,))
    p["w_fc1"] = nrm(next(keys), (FEAT, FEAT))                          # fc[0]
    p["b_fc1"] = nrm(next(keys), (FEAT,))
    p["w_fc2"] = nrm(next(keys), (2, FEAT))                             # fc[2]
    p["b_fc2"] = nrm(next(keys), (2,))
    return p


def pack_params(p):
    """Pack every parameter into ONE (224, 128) f32 slab (single DMA, static in-kernel slices)."""
    # Conv: zero-embed each branch's taps in the center of a KMAX window ('same' alignment) and
    # concat branches along output channels -> one im2col matmul computes all branches + concat.
    w_blocks, b_blocks = [], []
    for bi, k_sz in enumerate(PARA_KER):
        w = p[f"conv_w{bi}"]                                            # (COUT, CIN, k)
        off = (KMAX - k_sz) // 2
        w7 = jnp.zeros((COUT, CIN, KMAX), jnp.float32).at[:, :, off:off + k_sz].set(w)
        w_blocks.append(jnp.transpose(w7, (2, 1, 0)).reshape(KMAX * CIN, COUT))
        b_blocks.append(p[f"conv_b{bi}"])
    wconv = jnp.concatenate(w_blocks, axis=-1)                          # (28, 12)
    bconv = jnp.concatenate(b_blocks)                                   # (12,)

    # LSTM: interleaved gate columns [i_f i_b | f_f f_b | g_f g_b | o_f o_b] (width 12 each).
    def gate_T(w):                                                      # (4H, C) -> 4 x (C, H)
        return [w[g * H:(g + 1) * H, :].T for g in range(4)]
    gih_f, gih_b = gate_T(p["w_ih_f"]), gate_T(p["w_ih_b"])
    ghh_f, ghh_b = gate_T(p["w_hh_f"]), gate_T(p["w_hh_b"])
    wih = jnp.concatenate([m for g in range(4) for m in (gih_f[g], gih_b[g])], axis=-1)  # (12, 96)
    Z = jnp.zeros((H, H), jnp.float32)
    whh_top = jnp.concatenate([m for g in range(4) for m in (ghh_f[g], Z)], axis=-1)     # h_f rows
    whh_bot = jnp.concatenate([m for g in range(4) for m in (Z, ghh_b[g])], axis=-1)     # h_b rows
    whh = jnp.concatenate([whh_top, whh_bot], axis=0)                   # (24, 96) block-diagonal
    bsum_f = p["b_ih_f"] + p["b_hh_f"]
    bsum_b = p["b_ih_b"] + p["b_hh_b"]
    bg = jnp.concatenate([v for g in range(4)
                          for v in (bsum_f[g * H:(g + 1) * H], bsum_b[g * H:(g + 1) * H])])  # (96,)

    # Output Linear per timestep + Flatten + fc[0] (no nonlinearity in between -> exact fold):
    #   flat = h_all @ kron(I_T, w_lin.T) + tile(b_lin, T);   h1_pre = flat @ w_fc1.T + b_fc1
    w_big = jnp.kron(jnp.eye(T, dtype=jnp.float32), p["w_lin"].T)       # (96, 48)
    b_big = jnp.tile(p["b_lin"], T)                                     # (48,)
    w_h1 = w_big @ p["w_fc1"].T                                         # (96, 48)
    b_h1 = b_big @ p["w_fc1"].T + p["b_fc1"]                            # (48,)

    # 2-class softmax as sigmoid of the logit difference.
    w2d = (p["w_fc2"][1] - p["w_fc2"][0])[:, None]                      # (48, 1)
    b2d = p["b_fc2"][1] - p["b_fc2"][0]                                 # scalar

    slab = jnp.zeros((SLAB_ROWS, SLAB_COLS), jnp.float32)
    slab = slab.at[ROW_WCONV:ROW_WCONV + KMAX * CIN, 0:BINODE].set(wconv)
    slab = slab.at[ROW_WIH:ROW_WIH + H, 0:8 * H].set(wih)
    slab = slab.at[ROW_WHH:ROW_WHH + 2 * H, 0:8 * H].set(whh)
    slab = slab.at[ROW_WH1:ROW_WH1 + T * 2 * H, 0:FEAT].set(w_h1)
    slab = slab.at[ROW_W2D:ROW_W2D + FEAT, 0:1].set(w2d)
    slab = slab.at[ROW_BCONV, 0:BINODE].set(bconv)
    slab = slab.at[ROW_BG, 0:8 * H].set(bg)
    slab = slab.at[ROW_BH1, 0:FEAT].set(b_h1)
    slab = slab.at[ROW_B2D, 0].set(b2d)
    return slab


# ---------------- Forward: pad + im2col in the wrapper, then a single fused Pallas kernel.
@jax.jit
def deepromoter_forward(x, slab):
    pad = (KMAX - 1) // 2
    xp = jnp.pad(x, ((0, 0), (pad, pad), (0, 0)))                       # one shared padded buffer
    # Wrapper-side im2col (lane-dense kernel input; avoids in-kernel lane concats / relayouts).
    xcol = jnp.concatenate([xp[:, dk:dk + L, :] for dk in range(KMAX)],
                           axis=-1).reshape(B * L, KMAX * CIN)          # (48, 28)
    return pl.pallas_call(
        deepromoter_kernel,
        out_shape=jax.ShapeDtypeStruct((B, 2), jnp.float32),
        in_specs=[_VMEM, _VMEM],
        out_specs=_VMEM,
        # NOTE: at B=2 a grid is pure overhead.  At realistic batch sizes add a batch grid axis
        # with dimension_semantics=("parallel",) (uses both v7x TensorCores) and size the block
        # VMEM against v7x's 32 MiB scoped / 64 MiB physical limits (vmem_limit_bytes).
    )(xcol, slab)


if __name__ == "__main__":
    slab = pack_params(init_params(jax.random.PRNGKey(42)))

    # Deterministic example input: one-hot DNA sequence (B, L, 4).
    key = jax.random.PRNGKey(0)
    idx = jax.random.randint(key, (B, L), 0, 4)
    x = jax.nn.one_hot(idx, 4, dtype=jnp.float32)

    out = deepromoter_forward(x, slab)
    out = jax.block_until_ready(out)

    assert out.shape == (B, 2)
    assert bool(jnp.all(jnp.isfinite(out)))
    assert bool(jnp.allclose(jnp.sum(out, axis=1), 1.0, atol=1e-5))
    print("KERNEL_OK")
</pallas_src>

<mosaic_0001>
module attributes {stable_mosaic.version = 11 : i64} {
  func.func @deepromoter_kernel(%arg0: memref<48x28xf32, #tpu.memory_space<vmem>>, %arg1: memref<224x128xf32, #tpu.memory_space<vmem>>, %arg2: memref<2x2xf32, #tpu.memory_space<vmem>>) attributes {dimension_semantics = [], scalar_prefetch = 0 : i64, scratch_operands = 0 : i64, tpu.core_type = #tpu.core_type<tc>} {
    %c0 = arith.constant 0 : index
    %c0_0 = arith.constant 0 : index
    %0 = vector.load %arg1[%c0, %c0_0] : memref<224x128xf32, #tpu.memory_space<vmem>>, vector<28x12xf32>
    %c216 = arith.constant 216 : index
    %c0_1 = arith.constant 0 : index
    %1 = vector.load %arg1[%c216, %c0_1] : memref<224x128xf32, #tpu.memory_space<vmem>>, vector<1x12xf32>
    %c0_2 = arith.constant 0 : index
    %c0_3 = arith.constant 0 : index
    %2 = vector.load %arg0[%c0_2, %c0_3] : memref<48x28xf32, #tpu.memory_space<vmem>>, vector<48x28xf32>
    %cst = arith.constant dense<0.000000e+00> : vector<48x12xf32>
    %3 = tpu.matmul %2, %0, %cst {dimension_numbers = #tpu.dot_dimension_numbers<[1], [0], [0], [1], [0, 0, 1, 1], [], []>} : vector<48x28xf32>, vector<28x12xf32>, vector<48x12xf32> -> vector<48x12xf32>
    %4 = vector.broadcast %1 : vector<1x12xf32> to vector<48x12xf32>
    %5 = arith.addf %3, %4 : vector<48x12xf32>
    %cst_4 = arith.constant 0.000000e+00 : f32
    %6 = vector.broadcast %cst_4 : f32 to vector<48x12xf32>
    %7 = arith.maximumf %5, %6 : vector<48x12xf32>
    %8 = vector.shape_cast %7 : vector<48x12xf32> to vector<2x4x6x12xf32>
    %cst_5 = arith.constant dense<0xFF800000> : vector<2x4x12xf32>
    %9 = vector.multi_reduction <maximumf>, %8, %cst_5 [2] : vector<2x4x6x12xf32> to vector<2x4x12xf32>
    %c32 = arith.constant 32 : index
    %c0_6 = arith.constant 0 : index
    %10 = vector.load %arg1[%c32, %c0_6] : memref<224x128xf32, #tpu.memory_space<vmem>>, vector<12x96xf32>
    %c217 = arith.constant 217 : index
    %c0_7 = arith.constant 0 : index
    %11 = vector.load %arg1[%c217, %c0_7] : memref<224x128xf32, #tpu.memory_space<vmem>>, vector<1x96xf32>
    %12 = vector.shape_cast %9 : vector<2x4x12xf32> to vector<8x12xf32>
    %cst_8 = arith.constant dense<0.000000e+00> : vector<8x96xf32>
    %13 = tpu.matmul %12, %10, %cst_8 {dimension_numbers = #tpu.dot_dimension_numbers<[1], [0], [0], [1], [0, 0, 1, 1], [], []>} : vector<8x12xf32>, vector<12x96xf32>, vector<8x96xf32> -> vector<8x96xf32>
    %14 = vector.broadcast %11 : vector<1x96xf32> to vector<8x96xf32>
    %15 = arith.addf %13, %14 : vector<8x96xf32>
    %16 = vector.shape_cast %15 : vector<8x96xf32> to vector<2x4x96xf32>
    %c48 = arith.constant 48 : index
    %c0_9 = arith.constant 0 : index
    %17 = vector.load %arg1[%c48, %c0_9] : memref<224x128xf32, #tpu.memory_space<vmem>>, vector<24x96xf32>
    %18 = tpu.iota {dimensions = array<i32: 1>} : vector<1x96xi32>
    %c24_i32 = arith.constant 24 : i32
    %c0_i32 = arith.constant 0 : i32
    %19 = arith.cmpi eq, %c24_i32, %c0_i32 : i32
    %c1_i32 = arith.constant 1 : i32
    %20 = arith.select %19, %c1_i32, %c24_i32 : i32
    %21 = vector.broadcast %20 : i32 to vector<1x96xi32>
    %22 = arith.remsi %18, %21 : vector<1x96xi32>
    %c0_i32_10 = arith.constant 0 : i32
    %23 = vector.broadcast %c0_i32_10 : i32 to vector<1x96xi32>
    %24 = arith.cmpi ne, %22, %23 : vector<1x96xi32>
    %c0_i32_11 = arith.constant 0 : i32
    %25 = vector.broadcast %c0_i32_11 : i32 to vector<1x96xi32>
    %26 = arith.cmpi slt, %22, %25 : vector<1x96xi32>
    %c0_i32_12 = arith.constant 0 : i32
    %27 = arith.cmpi slt, %20, %c0_i32_12 : i32
    %28 = vector.broadcast %27 : i1 to vector<1x96xi1>
    %29 = vector.broadcast %28 : vector<1x96xi1> to vector<1x96xi1>
    %30 = arith.xori %26, %29 : vector<1x96xi1>
    %31 = arith.andi %30, %24 : vector<1x96xi1>
    %32 = vector.broadcast %20 : i32 to vector<1x96xi32>
    %33 = arith.addi %22, %32 : vector<1x96xi32>
    %34 = arith.select %31, %33, %22 : vector<1x96xi1>, vector<1x96xi32>
    %c12_i32 = arith.constant 12 : i32
    %35 = vector.broadcast %c12_i32 : i32 to vector<1x96xi32>
    %36 = arith.cmpi slt, %34, %35 : vector<1x96xi32>
    %cst_13 = arith.constant 0.000000e+00 : f32
    %37 = vector.broadcast %cst_13 : f32 to vector<2x24xf32>
    %cst_14 = arith.constant 0.000000e+00 : f32
    %38 = vector.broadcast %cst_14 : f32 to vector<2x24xf32>
    %39 = vector.extract_strided_slice %16 {offsets = [0, 0, 0], sizes = [2, 1, 96], strides = [1, 1, 1]} : vector<2x4x96xf32> to vector<2x1x96xf32>
    %40 = vector.shape_cast %39 : vector<2x1x96xf32> to vector<2x96xf32>
    %41 = vector.extract_strided_slice %16 {offsets = [0, 3, 0], sizes = [2, 1, 96], strides = [1, 1, 1]} : vector<2x4x96xf32> to vector<2x1x96xf32>
    %42 = vector.shape_cast %41 : vector<2x1x96xf32> to vector<2x96xf32>
    %43 = vector.shape_cast %36 : vector<1x96xi1> to vector<1x96xi1>
    %44 = vector.broadcast %43 : vector<1x96xi1> to vector<2x96xi1>
    %45 = arith.select %44, %40, %42 : vector<2x96xi1>, vector<2x96xf32>
    %cst_15 = arith.constant dense<0.000000e+00> : vector<2x96xf32>
    %46 = tpu.matmul %37, %17, %cst_15 {dimension_numbers = #tpu.dot_dimension_numbers<[1], [0], [0], [1], [0, 0, 1, 1], [], []>} : vector<2x24xf32>, vector<24x96xf32>, vector<2x96xf32> -> vector<2x96xf32>
    %47 = arith.addf %46, %45 : vector<2x96xf32>
    %48 = vector.extract_strided_slice %47 {offsets = [0, 0], sizes = [2, 24], strides = [1, 1]} : vector<2x96xf32> to vector<2x24xf32>
    %cst_16 = arith.constant 0.000000e+00 : f32
    %49 = vector.broadcast %cst_16 : f32 to vector<2x24xf32>
    %50 = arith.subf %49, %48 : vector<2x24xf32>
    %51 = math.exp %50 : vector<2x24xf32>
    %cst_17 = arith.constant 1.000000e+00 : f32
    %52 = vector.broadcast %cst_17 : f32 to vector<2x24xf32>
    %53 = arith.addf %52, %51 : vector<2x24xf32>
    %54 = tpu.reciprocal %53 {approx = true} : vector<2x24xf32> -> vector<2x24xf32>
    %55 = vector.extract_strided_slice %47 {offsets = [0, 24], sizes = [2, 24], strides = [1, 1]} : vector<2x96xf32> to vector<2x24xf32>
    %cst_18 = arith.constant 0.000000e+00 : f32
    %56 = vector.broadcast %cst_18 : f32 to vector<2x24xf32>
    %57 = arith.subf %56, %55 : vector<2x24xf32>
    %58 = math.exp %57 : vector<2x24xf32>
    %cst_19 = arith.constant 1.000000e+00 : f32
    %59 = vector.broadcast %cst_19 : f32 to vector<2x24xf32>
    %60 = arith.addf %59, %58 : vector<2x24xf32>
    %61 = tpu.reciprocal %60 {approx = true} : vector<2x24xf32> -> vector<2x24xf32>
    %62 = vector.extract_strided_slice %47 {offsets = [0, 48], sizes = [2, 24], strides = [1, 1]} : vector<2x96xf32> to vector<2x24xf32>
    %63 = math.tanh %62 : vector<2x24xf32>
    %64 = vector.extract_strided_slice %47 {offsets = [0, 72], sizes = [2, 24], strides = [1, 1]} : vector<2x96xf32> to vector<2x24xf32>
    %cst_20 = arith.constant 0.000000e+00 : f32
    %65 = vector.broadcast %cst_20 : f32 to vector<2x24xf32>
    %66 = arith.subf %65, %64 : vector<2x24xf32>
    %67 = math.exp %66 : vector<2x24xf32>
    %cst_21 = arith.constant 1.000000e+00 : f32
    %68 = vector.broadcast %cst_21 : f32 to vector<2x24xf32>
    %69 = arith.addf %68, %67 : vector<2x24xf32>
    %70 = tpu.reciprocal %69 {approx = true} : vector<2x24xf32> -> vector<2x24xf32>
    %71 = arith.mulf %61, %38 : vector<2x24xf32>
    %72 = arith.mulf %54, %63 : vector<2x24xf32>
    %73 = arith.addf %71, %72 : vector<2x24xf32>
    %74 = math.tanh %73 : vector<2x24xf32>
    %75 = arith.mulf %70, %74 : vector<2x24xf32>
    %76 = vector.extract_strided_slice %75 {offsets = [0, 0], sizes = [2, 12], strides = [1, 1]} : vector<2x24xf32> to vector<2x12xf32>
    %77 = vector.extract_strided_slice %75 {offsets = [0, 12], sizes = [2, 12], strides = [1, 1]} : vector<2x24xf32> to vector<2x12xf32>
    %78 = vector.extract_strided_slice %16 {offsets = [0, 1, 0], sizes = [2, 1, 96], strides = [1, 1, 1]} : vector<2x4x96xf32> to vector<2x1x96xf32>
    %79 = vector.shape_cast %78 : vector<2x1x96xf32> to vector<2x96xf32>
    %80 = vector.extract_strided_slice %16 {offsets = [0, 2, 0], sizes = [2, 1, 96], strides = [1, 1, 1]} : vector<2x4x96xf32> to vector<2x1x96xf32>
    %81 = vector.shape_cast %80 : vector<2x1x96xf32> to vector<2x96xf32>
    %82 = vector.shape_cast %36 : vector<1x96xi1> to vector<1x96xi1>
    %83 = vector.broadcast %82 : vector<1x96xi1> to vector<2x96xi1>
    %84 = arith.select %83, %79, %81 : vector<2x96xi1>, vector<2x96xf32>
    %cst_22 = arith.constant dense<0.000000e+00> : vector<2x96xf32>
    %85 = tpu.matmul %75, %17, %cst_22 {dimension_numbers = #tpu.dot_dimension_numbers<[1], [0], [0], [1], [0, 0, 1, 1], [], []>} : vector<2x24xf32>, vector<24x96xf32>, vector<2x96xf32> -> vector<2x96xf32>
    %86 = arith.addf %85, %84 : vector<2x96xf32>
    %87 = vector.extract_strided_slice %86 {offsets = [0, 0], sizes = [2, 24], strides = [1, 1]} : vector<2x96xf32> to vector<2x24xf32>
    %cst_23 = arith.constant 0.000000e+00 : f32
    %88 = vector.broadcast %cst_23 : f32 to vector<2x24xf32>
    %89 = arith.subf %88, %87 : vector<2x24xf32>
    %90 = math.exp %89 : vector<2x24xf32>
    %cst_24 = arith.constant 1.000000e+00 : f32
    %91 = vector.broadcast %cst_24 : f32 to vector<2x24xf32>
    %92 = arith.addf %91, %90 : vector<2x24xf32>
    %93 = tpu.reciprocal %92 {approx = true} : vector<2x24xf32> -> vector<2x24xf32>
    %94 = vector.extract_strided_slice %86 {offsets = [0, 24], sizes = [2, 24], strides = [1, 1]} : vector<2x96xf32> to vector<2x24xf32>
    %cst_25 = arith.constant 0.000000e+00 : f32
    %95 = vector.broadcast %cst_25 : f32 to vector<2x24xf32>
    %96 = arith.subf %95, %94 : vector<2x24xf32>
    %97 = math.exp %96 : vector<2x24xf32>
    %cst_26 = arith.constant 1.000000e+00 : f32
    %98 = vector.broadcast %cst_26 : f32 to vector<2x24xf32>
    %99 = arith.addf %98, %97 : vector<2x24xf32>
    %100 = tpu.reciprocal %99 {approx = true} : vector<2x24xf32> -> vector<2x24xf32>
    %101 = vector.extract_strided_slice %86 {offsets = [0, 48], sizes = [2, 24], strides = [1, 1]} : vector<2x96xf32> to vector<2x24xf32>
    %102 = math.tanh %101 : vector<2x24xf32>
    %103 = vector.extract_strided_slice %86 {offsets = [0, 72], sizes = [2, 24], strides = [1, 1]} : vector<2x96xf32> to vector<2x24xf32>
    %cst_27 = arith.constant 0.000000e+00 : f32
    %104 = vector.broadcast %cst_27 : f32 to vector<2x24xf32>
    %105 = arith.subf %104, %103 : vector<2x24xf32>
    %106 = math.exp %105 : vector<2x24xf32>
    %cst_28 = arith.constant 1.000000e+00 : f32
    %107 = vector.broadcast %cst_28 : f32 to vector<2x24xf32>
    %108 = arith.addf %107, %106 : vector<2x24xf32>
    %109 = tpu.reciprocal %108 {approx = true} : vector<2x24xf32> -> vector<2x24xf32>
    %110 = arith.mulf %100, %73 : vector<2x24xf32>
    %111 = arith.mulf %93, %102 : vector<2x24xf32>
    %112 = arith.addf %110, %111 : vector<2x24xf32>
    %113 = math.tanh %112 : vector<2x24xf32>
    %114 = arith.mulf %109, %113 : vector<2x24xf32>
    %115 = vector.extract_strided_slice %114 {offsets = [0, 0], sizes = [2, 12], strides = [1, 1]} : vector<2x24xf32> to vector<2x12xf32>
    %116 = vector.extract_strided_slice %114 {offsets = [0, 12], sizes = [2, 12], strides = [1, 1]} : vector<2x24xf32> to vector<2x12xf32>
    %117 = vector.extract_strided_slice %16 {offsets = [0, 2, 0], sizes = [2, 1, 96], strides = [1, 1, 1]} : vector<2x4x96xf32> to vector<2x1x96xf32>
    %118 = vector.shape_cast %117 : vector<2x1x96xf32> to vector<2x96xf32>
    %119 = vector.extract_strided_slice %16 {offsets = [0, 1, 0], sizes = [2, 1, 96], strides = [1, 1, 1]} : vector<2x4x96xf32> to vector<2x1x96xf32>
    %120 = vector.shape_cast %119 : vector<2x1x96xf32> to vector<2x96xf32>
    %121 = vector.shape_cast %36 : vector<1x96xi1> to vector<1x96xi1>
    %122 = vector.broadcast %121 : vector<1x96xi1> to vector<2x96xi1>
    %123 = arith.select %122, %118, %120 : vector<2x96xi1>, vector<2x96xf32>
    %cst_29 = arith.constant dense<0.000000e+00> : vector<2x96xf32>
    %124 = tpu.matmul %114, %17, %cst_29 {dimension_numbers = #tpu.dot_dimension_numbers<[1], [0], [0], [1], [0, 0, 1, 1], [], []>} : vector<2x24xf32>, vector<24x96xf32>, vector<2x96xf32> -> vector<2x96xf32>
    %125 = arith.addf %124, %123 : vector<2x96xf32>
    %126 = vector.extract_strided_slice %125 {offsets = [0, 0], sizes = [2, 24], strides = [1, 1]} : vector<2x96xf32> to vector<2x24xf32>
    %cst_30 = arith.constant 0.000000e+00 : f32
    %127 = vector.broadcast %cst_30 : f32 to vector<2x24xf32>
    %128 = arith.subf %127, %126 : vector<2x24xf32>
    %129 = math.exp %128 : vector<2x24xf32>
    %cst_31 = arith.constant 1.000000e+00 : f32
    %130 = vector.broadcast %cst_31 : f32 to vector<2x24xf32>
    %131 = arith.addf %130, %129 : vector<2x24xf32>
    %132 = tpu.reciprocal %131 {approx = true} : vector<2x24xf32> -> vector<2x24xf32>
    %133 = vector.extract_strided_slice %125 {offsets = [0, 24], sizes = [2, 24], strides = [1, 1]} : vector<2x96xf32> to vector<2x24xf32>
    %cst_32 = arith.constant 0.000000e+00 : f32
    %134 = vector.broadcast %cst_32 : f32 to vector<2x24xf32>
    %135 = arith.subf %134, %133 : vector<2x24xf32>
    %136 = math.exp %135 : vector<2x24xf32>
    %cst_33 = arith.constant 1.000000e+00 : f32
    %137 = vector.broadcast %cst_33 : f32 to vector<2x24xf32>
    %138 = arith.addf %137, %136 : vector<2x24xf32>
    %139 = tpu.reciprocal %138 {approx = true} : vector<2x24xf32> -> vector<2x24xf32>
    %140 = vector.extract_strided_slice %125 {offsets = [0, 48], sizes = [2, 24], strides = [1, 1]} : vector<2x96xf32> to vector<2x24xf32>
    %141 = math.tanh %140 : vector<2x24xf32>
    %142 = vector.extract_strided_slice %125 {offsets = [0, 72], sizes = [2, 24], strides = [1, 1]} : vector<2x96xf32> to vector<2x24xf32>
    %cst_34 = arith.constant 0.000000e+00 : f32
    %143 = vector.broadcast %cst_34 : f32 to vector<2x24xf32>
    %144 = arith.subf %143, %142 : vector<2x24xf32>
    %145 = math.exp %144 : vector<2x24xf32>
    %cst_35 = arith.constant 1.000000e+00 : f32
    %146 = vector.broadcast %cst_35 : f32 to vector<2x24xf32>
    %147 = arith.addf %146, %145 : vector<2x24xf32>
    %148 = tpu.reciprocal %147 {approx = true} : vector<2x24xf32> -> vector<2x24xf32>
    %149 = arith.mulf %139, %112 : vector<2x24xf32>
    %150 = arith.mulf %132, %141 : vector<2x24xf32>
    %151 = arith.addf %149, %150 : vector<2x24xf32>
    %152 = math.tanh %151 : vector<2x24xf32>
    %153 = arith.mulf %148, %152 : vector<2x24xf32>
    %154 = vector.extract_strided_slice %153 {offsets = [0, 0], sizes = [2, 12], strides = [1, 1]} : vector<2x24xf32> to vector<2x12xf32>
    %155 = vector.extract_strided_slice %153 {offsets = [0, 12], sizes = [2, 12], strides = [1, 1]} : vector<2x24xf32> to vector<2x12xf32>
    %156 = vector.extract_strided_slice %16 {offsets = [0, 3, 0], sizes = [2, 1, 96], strides = [1, 1, 1]} : vector<2x4x96xf32> to vector<2x1x96xf32>
    %157 = vector.shape_cast %156 : vector<2x1x96xf32> to vector<2x96xf32>
    %158 = vector.extract_strided_slice %16 {offsets = [0, 0, 0], sizes = [2, 1, 96], strides = [1, 1, 1]} : vector<2x4x96xf32> to vector<2x1x96xf32>
    %159 = vector.shape_cast %158 : vector<2x1x96xf32> to vector<2x96xf32>
    %160 = vector.shape_cast %36 : vector<1x96xi1> to vector<1x96xi1>
    %161 = vector.broadcast %160 : vector<1x96xi1> to vector<2x96xi1>
    %162 = arith.select %161, %157, %159 : vector<2x96xi1>, vector<2x96xf32>
    %cst_36 = arith.constant dense<0.000000e+00> : vector<2x96xf32>
    %163 = tpu.matmul %153, %17, %cst_36 {dimension_numbers = #tpu.dot_dimension_numbers<[1], [0], [0], [1], [0, 0, 1, 1], [], []>} : vector<2x24xf32>, vector<24x96xf32>, vector<2x96xf32> -> vector<2x96xf32>
    %164 = arith.addf %163, %162 : vector<2x96xf32>
    %165 = vector.extract_strided_slice %164 {offsets = [0, 0], sizes = [2, 24], strides = [1, 1]} : vector<2x96xf32> to vector<2x24xf32>
    %cst_37 = arith.constant 0.000000e+00 : f32
    %166 = vector.broadcast %cst_37 : f32 to vector<2x24xf32>
    %167 = arith.subf %166, %165 : vector<2x24xf32>
    %168 = math.exp %167 : vector<2x24xf32>
    %cst_38 = arith.constant 1.000000e+00 : f32
    %169 = vector.broadcast %cst_38 : f32 to vector<2x24xf32>
    %170 = arith.addf %169, %168 : vector<2x24xf32>
    %171 = tpu.reciprocal %170 {approx = true} : vector<2x24xf32> -> vector<2x24xf32>
    %172 = vector.extract_strided_slice %164 {offsets = [0, 24], sizes = [2, 24], strides = [1, 1]} : vector<2x96xf32> to vector<2x24xf32>
    %cst_39 = arith.constant 0.000000e+00 : f32
    %173 = vector.broadcast %cst_39 : f32 to vector<2x24xf32>
    %174 = arith.subf %173, %172 : vector<2x24xf32>
    %175 = math.exp %174 : vector<2x24xf32>
    %cst_40 = arith.constant 1.000000e+00 : f32
    %176 = vector.broadcast %cst_40 : f32 to vector<2x24xf32>
    %177 = arith.addf %176, %175 : vector<2x24xf32>
    %178 = tpu.reciprocal %177 {approx = true} : vector<2x24xf32> -> vector<2x24xf32>
    %179 = vector.extract_strided_slice %164 {offsets = [0, 48], sizes = [2, 24], strides = [1, 1]} : vector<2x96xf32> to vector<2x24xf32>
    %180 = math.tanh %179 : vector<2x24xf32>
    %181 = vector.extract_strided_slice %164 {offsets = [0, 72], sizes = [2, 24], strides = [1, 1]} : vector<2x96xf32> to vector<2x24xf32>
    %cst_41 = arith.constant 0.000000e+00 : f32
    %182 = vector.broadcast %cst_41 : f32 to vector<2x24xf32>
    %183 = arith.subf %182, %181 : vector<2x24xf32>
    %184 = math.exp %183 : vector<2x24xf32>
    %cst_42 = arith.constant 1.000000e+00 : f32
    %185 = vector.broadcast %cst_42 : f32 to vector<2x24xf32>
    %186 = arith.addf %185, %184 : vector<2x24xf32>
    %187 = tpu.reciprocal %186 {approx = true} : vector<2x24xf32> -> vector<2x24xf32>
    %188 = arith.mulf %178, %151 : vector<2x24xf32>
    %189 = arith.mulf %171, %180 : vector<2x24xf32>
    %190 = arith.addf %188, %189 : vector<2x24xf32>
    %191 = math.tanh %190 : vector<2x24xf32>
    %192 = arith.mulf %187, %191 : vector<2x24xf32>
    %193 = vector.extract_strided_slice %192 {offsets = [0, 0], sizes = [2, 12], strides = [1, 1]} : vector<2x24xf32> to vector<2x12xf32>
    %194 = vector.extract_strided_slice %192 {offsets = [0, 12], sizes = [2, 12], strides = [1, 1]} : vector<2x24xf32> to vector<2x12xf32>
    %195 = tpu.concatenate %76, %194, %115, %155, %154, %116, %193, %77 in 1 : vector<2x12xf32>, vector<2x12xf32>, vector<2x12xf32>, vector<2x12xf32>, vector<2x12xf32>, vector<2x12xf32>, vector<2x12xf32>, vector<2x12xf32> -> vector<2x96xf32>
    %c72 = arith.constant 72 : index
    %c0_43 = arith.constant 0 : index
    %196 = vector.load %arg1[%c72, %c0_43] : memref<224x128xf32, #tpu.memory_space<vmem>>, vector<96x48xf32>
    %c218 = arith.constant 218 : index
    %c0_44 = arith.constant 0 : index
    %197 = vector.load %arg1[%c218, %c0_44] : memref<224x128xf32, #tpu.memory_space<vmem>>, vector<1x48xf32>
    %cst_45 = arith.constant dense<0.000000e+00> : vector<2x48xf32>
    %198 = tpu.matmul %195, %196, %cst_45 {dimension_numbers = #tpu.dot_dimension_numbers<[1], [0], [0], [1], [0, 0, 1, 1], [], []>} : vector<2x96xf32>, vector<96x48xf32>, vector<2x48xf32> -> vector<2x48xf32>
    %199 = vector.broadcast %197 : vector<1x48xf32> to vector<2x48xf32>
    %200 = arith.addf %198, %199 : vector<2x48xf32>
    %cst_46 = arith.constant 0.000000e+00 : f32
    %201 = vector.broadcast %cst_46 : f32 to vector<2x48xf32>
    %202 = arith.maximumf %200, %201 : vector<2x48xf32>
    %c168 = arith.constant 168 : index
    %c0_47 = arith.constant 0 : index
    %203 = vector.load %arg1[%c168, %c0_47] : memref<224x128xf32, #tpu.memory_space<vmem>>, vector<48x1xf32>
    %c219 = arith.constant 219 : index
    %c0_48 = arith.constant 0 : index
    %204 = vector.load %arg1[%c219, %c0_48] : memref<224x128xf32, #tpu.memory_space<vmem>>, vector<1x1xf32>
    %cst_49 = arith.constant dense<0.000000e+00> : vector<2x1xf32>
    %205 = tpu.matmul %202, %203, %cst_49 {dimension_numbers = #tpu.dot_dimension_numbers<[1], [0], [0], [1], [0, 0, 1, 1], [], []>} : vector<2x48xf32>, vector<48x1xf32>, vector<2x1xf32> -> vector<2x1xf32>
    %206 = vector.broadcast %204 : vector<1x1xf32> to vector<2x1xf32>
    %207 = arith.addf %205, %206 : vector<2x1xf32>
    %cst_50 = arith.constant 0.000000e+00 : f32
    %208 = vector.broadcast %cst_50 : f32 to vector<2x1xf32>
    %209 = arith.subf %208, %207 : vector<2x1xf32>
    %210 = math.exp %209 : vector<2x1xf32>
    %cst_51 = arith.constant 1.000000e+00 : f32
    %211 = vector.broadcast %cst_51 : f32 to vector<2x1xf32>
    %212 = arith.addf %211, %210 : vector<2x1xf32>
    %cst_52 = arith.constant 1.000000e+00 : f32
    %213 = vector.broadcast %cst_52 : f32 to vector<2x1xf32>
    %214 = arith.divf %213, %212 : vector<2x1xf32>
    %cst_53 = arith.constant 1.000000e+00 : f32
    %215 = vector.broadcast %cst_53 : f32 to vector<2x1xf32>
    %216 = arith.subf %215, %214 : vector<2x1xf32>
    %217 = tpu.concatenate %216, %214 in 1 : vector<2x1xf32>, vector<2x1xf32> -> vector<2x2xf32>
    %c0_54 = arith.constant 0 : index
    %c0_55 = arith.constant 0 : index
    %218 = vector.load %arg2[%c0_54, %c0_55] : memref<2x2xf32, #tpu.memory_space<vmem>>, vector<2x2xf32>
    tpu.vector_store %arg2[%c0_54, %c0_55], %217 {strides = array<i32>} : memref<2x2xf32, #tpu.memory_space<vmem>>, vector<2x2xf32>,
    return
  }
}

</mosaic_0001>

<llo_original>
// kernel: deepromoter_forward.1
$region0: #{deepromoter_forward.1}
  #allocation0 [shape = 'u32[]', space=smem, size = 0x4, offset = 0x4, fixed_abs, tag = 'smem constant byte address 0x4 - core index']
  #allocation1 [shape = 'u32[144,128]{1,0:T(1,128)}', space=vmem, size = 0x12000, scoped, tag = 'internal scratch']
  %s0 = inlined_call_operand.vmem [shape: f32[48,28], index: 0, kind: input, shape index: {}]
  %s1 = inlined_call_operand.vmem [shape: f32[224,128], index: 1, kind: input, shape index: {}]
  %s2 = inlined_call_operand.hbm [shape: f32[2,2], index: 2, kind: output, shape index: {}]
  %s3 = sld [smem:[#allocation0]]
  $region18: #{deepromoter_forward.1} parent=0
    _
  %s5 = ssub.s32 1, %s3
  %s6 = scalar_select 0, %s5, %s3
  $region1: #{deepromoter_forward.1} parent=0
    #allocation2 [shape = 'u8[1024]{0}', space=vmem, size = 0x400, scoped, tag = 'output window, operand 0, single buffered']
    #allocation3 [shape = 's32[1]{0}', space=sflag, size = 0x4, scoped, tag = 'scoped memory for deepromoter_forward.1']
    %7 = vsyncpa [#allocation3], 0
    // Predicated region
    $region2: #{deepromoter_forward.1} parent=1 // pred_check
      _
    $region3: #{deepromoter_forward.1} parent=1 // pred_check_branch
      %9 = sbr.rel (0) target = $region5
    $region4: #{deepromoter_forward.1} parent=1 // pred_region
      _
    $region5: #{deepromoter_forward.1} parent=1 // pred_fallthru
      _
    // Predicated region
    $region6: #{deepromoter_forward.1} parent=1 // pred_check
      _
    $region7: #{deepromoter_forward.1} parent=1 // pred_check_branch
      %11 = sbr.rel (0) target = $region9
    $region8: #{deepromoter_forward.1} parent=1 // pred_region
      _
    $region9: #{deepromoter_forward.1} parent=1 // pred_fallthru
      _
    %v12 = vld [vmem:[%s1] sm:$0xff]
    %v13 = vld [vmem:[%s1 + $0x8] sm:$0xff]
    %v14 = vld [vmem:[%s1 + $0x10] sm:$0xff]
    %v15 = vld [vmem:[%s1 + $0x18] sm:$0xf]
    %v16 = vld [vmem:[%s1 + $0xd8] sm:$0x1]
    %v17 = vld [vmem:[%s0] sm:$0xff]
    %v18 = vld [vmem:[%s0 + $0x8] sm:$0xff]
    %v19 = vld [vmem:[%s0 + $0x10] sm:$0xff]
    %v20 = vld [vmem:[%s0 + $0x18] sm:$0xff]
    %v21 = vld [vmem:[%s0 + $0x20] sm:$0xff]
    %v22 = vld [vmem:[%s0 + $0x28] sm:$0xff]
    %v23 = vlaneseq
    %v24 = vshrl.u32 %v23, 7
    %v25 = vsub.s32 0, %v24
    %v26 = vrot.slane %v16, %v25
    %vm27 = vcmask 228352
    %v29 = vsel %vm27, %v17, 0
    %v32 = vsel %vm27, %v18, 0
    %v35 = vsel %vm27, %v19, 0
    %v38 = vsel %vm27, %v20, 0
    %v41 = vsel %vm27, %v21, 0
    %v44 = vsel %vm27, %v22, 0
    %vm46 = vcmask 1043456
    %v48 = vsel %vm46, %v15, 0
    %50 = vmatprep.subr.mxu0 0.0
    %51 = vmatpush1.msra.mxu0 %v12
    %52 = vmatprep.subr.mxu0 0.0
    %53 = vmatpush1.msra.mxu0 %v13
    %54 = vmatprep.subr.mxu0 0.0
    %55 = vmatpush1.msra.mxu0 %v14
    %56 = vmatprep.subr.mxu0 0.0
    %57 = vmatpush1.msra.mxu0 %v48
    %58 = vmatprep.subr.mxu0 0.0
    %59 = vmatpush1.msra.mxu0 0.0
    %60 = vmatprep.subr.mxu0 0.0
    %61 = vmatpush1.msra.mxu0 0.0
    %62 = vmatprep.subr.mxu0 0.0
    %63 = vmatpush1.msra.mxu0 0.0
    %64 = vmatprep.subr.mxu0 0.0
    %65 = vmatpush1.msra.mxu0 0.0
    %66 = vmatprep.subr.mxu0 0.0
    %67 = vmatpush1.msra.mxu0 0.0
    %68 = vmatprep.subr.mxu0 0.0
    %69 = vmatpush1.msra.mxu0 0.0
    %70 = vmatprep.subr.mxu0 0.0
    %71 = vmatpush1.msra.mxu0 0.0
    %72 = vmatprep.subr.mxu0 0.0
    %73 = vmatpush1.msra.mxu0 0.0
    %74 = vmatprep.subr.mxu0 0.0
    %75 = vmatpush1.msra.mxu0 0.0
    %76 = vmatprep.subr.mxu0 0.0
    %77 = vmatpush1.msra.mxu0 0.0
    %78 = vmatprep.subr.mxu0 0.0
    %79 = vmatpush1.msra.mxu0 0.0
    %80 = vmatprep.subr.mxu0 0.0
    %81 = vmatpush1.msra.mxu0 0.0
    %82 = vmatprep.subr.mxu0 0.0
    %83 = vmatpush1.msra.mxu0 0.0
    %84 = vmatprep.subr.mxu0 0.0
    %85 = vmatpush1.msra.mxu0 0.0
    %86 = vmatprep.subr.mxu0 0.0
    %87 = vmatpush1.msra.mxu0 0.0
    %88 = vmatprep.subr.mxu0 0.0
    %89 = vmatpush1.msra.mxu0 0.0
    %90 = vmatprep.subr.mxu0 0.0
    %91 = vmatpush1.msra.mxu0 0.0
    %92 = vmatprep.subr.mxu0 0.0
    %93 = vmatpush1.msra.mxu0 0.0
    %94 = vmatprep.subr.mxu0 0.0
    %95 = vmatpush1.msra.mxu0 0.0
    %96 = vmatprep.subr.mxu0 0.0
    %97 = vmatpush1.msra.mxu0 0.0
    %98 = vmatprep.subr.mxu0 0.0
    %99 = vmatpush1.msra.mxu0 0.0
    %100 = vmatprep.subr.mxu0 0.0
    %101 = vmatpush1.msra.mxu0 0.0
    %102 = vmatprep.subr.mxu0 0.0
    %103 = vmatpush1.msra.mxu0 0.0
    %104 = vmatprep.subr.mxu0 0.0
    %105 = vmatpush1.msra.mxu0 0.0
    %106 = vmatprep.subr.mxu0 0.0
    %107 = vmatpush1.msra.mxu0 0.0
    %108 = vmatprep.subr.mxu0 0.0
    %109 = vmatpush1.msra.mxu0 0.0
    %110 = vmatprep.subr.mxu0 0.0
    %111 = vmatpush1.msra.mxu0 0.0
    %112 = vmatprep.subr.mxu0 0.0
    %113 = vmatpush1.msra.mxu0 0.0
    %114 = vmatprep.mubr.f32.mxu0 0.0
    %115 = vmatmul.mubr.f32.gmra.mrb[0].mxu0 %v29
    %v116 = vpop.f32.mrb[0].mxu0
    %v117 = vadd.f32 %v26, %v116
    %v118 = vpop.f32.mrb[0].mxu0
    %119 = vmatprep.mubr.f32.mxu0 0.0
    %120 = vmatmul.mubr.f32.gmra.mrb[0].mxu0 %v32
    %v121 = vpop.f32.mrb[0].mxu0
    %v122 = vadd.f32 %v26, %v121
    %v123 = vpop.f32.mrb[0].mxu0
    %124 = vmatprep.mubr.f32.mxu0 0.0
    %125 = vmatmul.mubr.f32.gmra.mrb[0].mxu0 %v35
    %v126 = vpop.f32.mrb[0].mxu0
    %v127 = vadd.f32 %v26, %v126
    %v128 = vpop.f32.mrb[0].mxu0
    %129 = vmatprep.mubr.f32.mxu0 0.0
    %130 = vmatmul.mubr.f32.gmra.mrb[0].mxu0 %v38
    %v131 = vpop.f32.mrb[0].mxu0
    %v132 = vadd.f32 %v26, %v131
    %v133 = vpop.f32.mrb[0].mxu0
    %134 = vmatprep.mubr.f32.mxu0 0.0
    %135 = vmatmul.mubr.f32.gmra.mrb[0].mxu0 %v41
    %v136 = vpop.f32.mrb[0].mxu0
    %v137 = vadd.f32 %v26, %v136
    %v138 = vpop.f32.mrb[0].mxu0
    %139 = vmatprep.mubr.f32.mxu0 0.0
    %140 = vmatmul.mubr.f32.gmra.mrb[0].mxu0 %v44
    %v141 = vpop.f32.mrb[0].mxu0
    %v142 = vadd.f32 %v26, %v141
    %v143 = vpop.f32.mrb[0].mxu0
    %144 = vdwg.mxu0
    %v145 = vmax.f32 %v117, 0.0
    %v146 = vmax.f32 %v122, 0.0
    %v147 = vmax.f32 %v127, 0.0
    %v148 = vmax.f32 %v132, 0.0
    %v149 = vmax.f32 %v137, 0.0
    %v150 = vmax.f32 %v142, 0.0
    %v157 = vcombine.high %v145, %v145
    %v159 = vunpack.c.l.s4 1983009808
    %v160 = vunpack.c.0.s8 %v159
    %v161 = vlaneseq
    %v162 = vshrl.u32 %v161, 7
    %v163 = vsub.s32 %v160, %v162
    %v164 = vrot.slane %v145, %v163
    %v166 = vunpack.c.l.s4 1983009808
    %v167 = vunpack.c.0.s8 %v166
    %v168 = vlaneseq
    %v169 = vshrl.u32 %v168, 7
    %v170 = vsub.s32 %v167, %v169
    %v171 = vrot.slane %v157, %v170
    %v172 = vcombine.high %v164, %v164
    %v173 = vcombine.high %v171, %v171
    %v174 = vcombine.high %v146, %v146
    %v176 = vunpack.c.l.s4 1983009808
    %v177 = vunpack.c.0.s8 %v176
    %v178 = vlaneseq
    %v179 = vshrl.u32 %v178, 7
    %v180 = vsub.s32 %v177, %v179
    %v181 = vrot.slane %v146, %v180
    %v183 = vunpack.c.l.s4 1983009808
    %v184 = vunpack.c.0.s8 %v183
    %v185 = vlaneseq
    %v186 = vshrl.u32 %v185, 7
    %v187 = vsub.s32 %v184, %v186
    %v188 = vrot.slane %v174, %v187
    %v189 = vcombine.high %v181, %v181
    %v190 = vcombine.high %v188, %v188
    %v191 = vcombine.high %v147, %v147
    %v193 = vunpack.c.l.s4 1983009808
    %v194 = vunpack.c.0.s8 %v193
    %v195 = vlaneseq
    %v196 = vshrl.u32 %v195, 7
    %v197 = vsub.s32 %v194, %v196
    %v198 = vrot.slane %v147, %v197
    %v200 = vunpack.c.l.s4 1983009808
    %v201 = vunpack.c.0.s8 %v200
    %v202 = vlaneseq
    %v203 = vshrl.u32 %v202, 7
    %v204 = vsub.s32 %v201, %v203
    %v205 = vrot.slane %v191, %v204
    %v206 = vcombine.high %v198, %v198
    %v207 = vcombine.high %v205, %v205
    %v208 = vcombine.high %v148, %v148
    %v210 = vunpack.c.l.s4 1983009808
    %v211 = vunpack.c.0.s8 %v210
    %v212 = vlaneseq
    %v213 = vshrl.u32 %v212, 7
    %v214 = vsub.s32 %v211, %v213
    %v215 = vrot.slane %v148, %v214
    %v217 = vunpack.c.l.s4 1983009808
    %v218 = vunpack.c.0.s8 %v217
    %v219 = vlaneseq
    %v220 = vshrl.u32 %v219, 7
    %v221 = vsub.s32 %v218, %v220
    %v222 = vrot.slane %v208, %v221
    %v223 = vcombine.high %v215, %v215
    %v224 = vcombine.high %v222, %v222
    %v225 = vcombine.high %v149, %v149
    %v227 = vunpack.c.l.s4 1983009808
    %v228 = vunpack.c.0.s8 %v227
    %v229 = vlaneseq
    %v230 = vshrl.u32 %v229, 7
    %v231 = vsub.s32 %v228, %v230
    %v232 = vrot.slane %v149, %v231
    %v234 = vunpack.c.l.s4 1983009808
    %v235 = vunpack.c.0.s8 %v234
    %v236 = vlaneseq
    %v237 = vshrl.u32 %v236, 7
    %v238 = vsub.s32 %v235, %v237
    %v239 = vrot.slane %v225, %v238
    %v240 = vcombine.high %v232, %v232
    %v241 = vcombine.high %v239, %v239
    %v242 = vcombine.high %v150, %v150
    %v244 = vunpack.c.l.s4 1983009808
    %v245 = vunpack.c.0.s8 %v244
    %v246 = vlaneseq
    %v247 = vshrl.u32 %v246, 7
    %v248 = vsub.s32 %v245, %v247
    %v249 = vrot.slane %v150, %v248
    %v251 = vunpack.c.l.s4 1983009808
    %v252 = vunpack.c.0.s8 %v251
    %v253 = vlaneseq
    %v254 = vshrl.u32 %v253, 7
    %v255 = vsub.s32 %v252, %v254
    %v256 = vrot.slane %v242, %v255
    %v257 = vcombine.high %v249, %v249
    %v258 = vcombine.high %v256, %v256
    %v259 = vcombine.low %v164, %v172
    %v261 = vunpack.c.l.s4 1983009808
    %v262 = vunpack.c.0.s8 %v261
    %v263 = vlaneseq
    %v264 = vshrl.u32 %v263, 7
    %v265 = vsub.s32 %v262, %v264
    %v266 = vrot.slane %v259, %v265
    %v268 = vunpack.c.l.s4 1983009808
    %v269 = vunpack.c.0.s8 %v268
    %v270 = vlaneseq
    %v271 = vshrl.u32 %v270, 7
    %v272 = vsub.s32 %v269, %v271
    %v273 = vrot.slane %v171, %v272
    %v274 = vcombine.low %v266, %v273
    %v275 = vcombine.low %v173, %v181
    %v277 = vunpack.c.l.s4 1983009808
    %v278 = vunpack.c.0.s8 %v277
    %v279 = vlaneseq
    %v280 = vshrl.u32 %v279, 7
    %v281 = vsub.s32 %v278, %v280
    %v282 = vrot.slane %v275, %v281
    %v284 = vunpack.c.l.s4 1983009808
    %v285 = vunpack.c.0.s8 %v284
    %v286 = vlaneseq
    %v287 = vshrl.u32 %v286, 7
    %v288 = vsub.s32 %v285, %v287
    %v289 = vrot.slane %v189, %v288
    %v290 = vcombine.low %v282, %v289
    %v291 = vcombine.low %v188, %v190
    %v293 = vunpack.c.l.s4 1983009808
    %v294 = vunpack.c.0.s8 %v293
    %v295 = vlaneseq
    %v296 = vshrl.u32 %v295, 7
    %v297 = vsub.s32 %v294, %v296
    %v298 = vrot.slane %v291, %v297
    %v300 = vunpack.c.l.s4 1983009808
    %v301 = vunpack.c.0.s8 %v300
    %v302 = vlaneseq
    %v303 = vshrl.u32 %v302, 7
    %v304 = vsub.s32 %v301, %v303
    %v305 = vrot.slane %v198, %v304
    %v306 = vcombine.low %v298, %v305
    %v307 = vcombine.low %v206, %v205
    %v309 = vunpack.c.l.s4 1983009808
    %v310 = vunpack.c.0.s8 %v309
    %v311 = vlaneseq
    %v312 = vshrl.u32 %v311, 7
    %v313 = vsub.s32 %v310, %v312
    %v314 = vrot.slane %v307, %v313
    %v316 = vunpack.c.l.s4 1983009808
    %v317 = vunpack.c.0.s8 %v316
    %v318 = vlaneseq
    %v319 = vshrl.u32 %v318, 7
    %v320 = vsub.s32 %v317, %v319
    %v321 = vrot.slane %v207, %v320
    %v322 = vcombine.low %v314, %v321
    %v323 = vcombine.low %v215, %v223
    %v325 = vunpack.c.l.s4 1983009808
    %v326 = vunpack.c.0.s8 %v325
    %v327 = vlaneseq
    %v328 = vshrl.u32 %v327, 7
    %v329 = vsub.s32 %v326, %v328
    %v330 = vrot.slane %v323, %v329
    %v332 = vunpack.c.l.s4 1983009808
    %v333 = vunpack.c.0.s8 %v332
    %v334 = vlaneseq
    %v335 = vshrl.u32 %v334, 7
    %v336 = vsub.s32 %v333, %v335
    %v337 = vrot.slane %v222, %v336
    %v338 = vcombine.low %v330, %v337
    %v339 = vcombine.low %v224, %v232
    %v341 = vunpack.c.l.s4 1983009808
    %v342 = vunpack.c.0.s8 %v341
    %v343 = vlaneseq
    %v344 = vshrl.u32 %v343, 7
    %v345 = vsub.s32 %v342, %v344
    %v346 = vrot.slane %v339, %v345
    %v348 = vunpack.c.l.s4 1983009808
    %v349 = vunpack.c.0.s8 %v348
    %v350 = vlaneseq
    %v351 = vshrl.u32 %v350, 7
    %v352 = vsub.s32 %v349, %v351
    %v353 = vrot.slane %v240, %v352
    %v354 = vcombine.low %v346, %v353
    %v355 = vcombine.low %v239, %v241
    %v357 = vunpack.c.l.s4 1983009808
    %v358 = vunpack.c.0.s8 %v357
    %v359 = vlaneseq
    %v360 = vshrl.u32 %v359, 7
    %v361 = vsub.s32 %v358, %v360
    %v362 = vrot.slane %v355, %v361
    %v364 = vunpack.c.l.s4 1983009808
    %v365 = vunpack.c.0.s8 %v364
    %v366 = vlaneseq
    %v367 = vshrl.u32 %v366, 7
    %v368 = vsub.s32 %v365, %v367
    %v369 = vrot.slane %v249, %v368
    %v370 = vcombine.low %v362, %v369
    %v371 = vcombine.low %v257, %v256
    %v373 = vunpack.c.l.s4 1983009808
    %v374 = vunpack.c.0.s8 %v373
    %v375 = vlaneseq
    %v376 = vshrl.u32 %v375, 7
    %v377 = vsub.s32 %v374, %v376
    %v378 = vrot.slane %v371, %v377
    %v380 = vunpack.c.l.s4 1983009808
    %v381 = vunpack.c.0.s8 %v380
    %v382 = vlaneseq
    %v383 = vshrl.u32 %v382, 7
    %v384 = vsub.s32 %v381, %v383
    %v385 = vrot.slane %v258, %v384
    %v386 = vcombine.low %v378, %v385
    %vm395 = vcmask 95232
    %v396 = vsel %vm395, %v274, -inf
    %v397 = vrot.slane %v396, 4
    %v398 = vmax.f32 %v396, %v397
    %v399 = vrot.slane %v398, 2
    %v400 = vmax.f32 %v398, %v399
    %v401 = vrot.slane %v400, 1
    %v402 = vmax.f32 %v400, %v401
    %v403 = vsel %vm395, %v290, -inf
    %v404 = vrot.slane %v403, 4
    %v405 = vmax.f32 %v403, %v404
    %v406 = vrot.slane %v405, 2
    %v407 = vmax.f32 %v405, %v406
    %v408 = vrot.slane %v407, 1
    %v409 = vmax.f32 %v407, %v408
    %v410 = vsel %vm395, %v306, -inf
    %v411 = vrot.slane %v410, 4
    %v412 = vmax.f32 %v410, %v411
    %v413 = vrot.slane %v412, 2
    %v414 = vmax.f32 %v412, %v413
    %v415 = vrot.slane %v414, 1
    %v416 = vmax.f32 %v414, %v415
    %v417 = vsel %vm395, %v322, -inf
    %v418 = vrot.slane %v417, 4
    %v419 = vmax.f32 %v417, %v418
    %v420 = vrot.slane %v419, 2
    %v421 = vmax.f32 %v419, %v420
    %v422 = vrot.slane %v421, 1
    %v423 = vmax.f32 %v421, %v422
    %v424 = vsel %vm395, %v338, -inf
    %v425 = vrot.slane %v424, 4
    %v426 = vmax.f32 %v424, %v425
    %v427 = vrot.slane %v426, 2
    %v428 = vmax.f32 %v426, %v427
    %v429 = vrot.slane %v428, 1
    %v430 = vmax.f32 %v428, %v429
    %v431 = vsel %vm395, %v354, -inf
    %v432 = vrot.slane %v431, 4
    %v433 = vmax.f32 %v431, %v432
    %v434 = vrot.slane %v433, 2
    %v435 = vmax.f32 %v433, %v434
    %v436 = vrot.slane %v435, 1
    %v437 = vmax.f32 %v435, %v436
    %v438 = vsel %vm395, %v370, -inf
    %v439 = vrot.slane %v438, 4
    %v440 = vmax.f32 %v438, %v439
    %v441 = vrot.slane %v440, 2
    %v442 = vmax.f32 %v440, %v441
    %v443 = vrot.slane %v442, 1
    %v444 = vmax.f32 %v442, %v443
    %v445 = vsel %vm395, %v386, -inf
    %v446 = vrot.slane %v445, 4
    %v447 = vmax.f32 %v445, %v446
    %v448 = vrot.slane %v447, 2
    %v449 = vmax.f32 %v447, %v448
    %v450 = vrot.slane %v449, 1
    %v451 = vmax.f32 %v449, %v450
    %v452 = vld [vmem:[%s1 + $0x20] sm:$0xff]
    %v453 = vld [vmem:[%s1 + $0x28] sm:$0xf]
    %v454 = vld [vmem:[%s1 + $0xd9] sm:$0x1]
    %v455 = vlaneseq
    %v456 = vshrl.u32 %v455, 7
    %v457 = vsub.s32 0, %v456
    %v458 = vrot.slane %v454, %v457
    %vm467 = vcmask 1041409
    %v468 = vsel %vm467, %v409, %v402
    %vm469 = vcmask 1042434
    %v470 = vsel %vm469, %v416, %v468
    %vm471 = vcmask 1043459
    %v472 = vsel %vm471, %v423, %v470
    %vm473 = vcmask 1044484
    %v474 = vsel %vm473, %v430, %v472
    %vm475 = vcmask 1045509
    %v476 = vsel %vm475, %v437, %v474
    %vm477 = vcmask 1046534
    %v478 = vsel %vm477, %v444, %v476
    %vm479 = vcmask 1047559
    %v480 = vsel %vm479, %v451, %v478
    %vm481 = vcmask 97280
    %v482 = vsel %vm481, %v480, 0
    %v485 = vsel %vm46, %v453, 0
    %487 = vmatprep.subr.mxu0 0.0
    %488 = vmatpush1.msra.mxu0 %v452
    %489 = vmatprep.subr.mxu0 0.0
    %490 = vmatpush1.msra.mxu0 %v485
    %491 = vmatprep.subr.mxu0 0.0
    %492 = vmatpush1.msra.mxu0 0.0
    %493 = vmatprep.subr.mxu0 0.0
    %494 = vmatpush1.msra.mxu0 0.0
    %495 = vmatprep.subr.mxu0 0.0
    %496 = vmatpush1.msra.mxu0 0.0
    %497 = vmatprep.subr.mxu0 0.0
    %498 = vmatpush1.msra.mxu0 0.0
    %499 = vmatprep.subr.mxu0 0.0
    %500 = vmatpush1.msra.mxu0 0.0
    %501 = vmatprep.subr.mxu0 0.0
    %502 = vmatpush1.msra.mxu0 0.0
    %503 = vmatprep.subr.mxu0 0.0
    %504 = vmatpush1.msra.mxu0 0.0
    %505 = vmatprep.subr.mxu0 0.0
    %506 = vmatpush1.msra.mxu0 0.0
    %507 = vmatprep.subr.mxu0 0.0
    %508 = vmatpush1.msra.mxu0 0.0
    %509 = vmatprep.subr.mxu0 0.0
    %510 = vmatpush1.msra.mxu0 0.0
    %511 = vmatprep.subr.mxu0 0.0
    %512 = vmatpush1.msra.mxu0 0.0
    %513 = vmatprep.subr.mxu0 0.0
    %514 = vmatpush1.msra.mxu0 0.0
    %515 = vmatprep.subr.mxu0 0.0
    %516 = vmatpush1.msra.mxu0 0.0
    %517 = vmatprep.subr.mxu0 0.0
    %518 = vmatpush1.msra.mxu0 0.0
    %519 = vmatprep.subr.mxu0 0.0
    %520 = vmatpush1.msra.mxu0 0.0
    %521 = vmatprep.subr.mxu0 0.0
    %522 = vmatpush1.msra.mxu0 0.0
    %523 = vmatprep.subr.mxu0 0.0
    %524 = vmatpush1.msra.mxu0 0.0
    %525 = vmatprep.subr.mxu0 0.0
    %526 = vmatpush1.msra.mxu0 0.0
    %527 = vmatprep.subr.mxu0 0.0
    %528 = vmatpush1.msra.mxu0 0.0
    %529 = vmatprep.subr.mxu0 0.0
    %530 = vmatpush1.msra.mxu0 0.0
    %531 = vmatprep.subr.mxu0 0.0
    %532 = vmatpush1.msra.mxu0 0.0
    %533 = vmatprep.subr.mxu0 0.0
    %534 = vmatpush1.msra.mxu0 0.0
    %535 = vmatprep.subr.mxu0 0.0
    %536 = vmatpush1.msra.mxu0 0.0
    %537 = vmatprep.subr.mxu0 0.0
    %538 = vmatpush1.msra.mxu0 0.0
    %539 = vmatprep.subr.mxu0 0.0
    %540 = vmatpush1.msra.mxu0 0.0
    %541 = vmatprep.subr.mxu0 0.0
    %542 = vmatpush1.msra.mxu0 0.0
    %543 = vmatprep.subr.mxu0 0.0
    %544 = vmatpush1.msra.mxu0 0.0
    %545 = vmatprep.subr.mxu0 0.0
    %546 = vmatpush1.msra.mxu0 0.0
    %547 = vmatprep.subr.mxu0 0.0
    %548 = vmatpush1.msra.mxu0 0.0
    %549 = vmatprep.subr.mxu0 0.0
    %550 = vmatpush1.msra.mxu0 0.0
    %551 = vmatprep.mubr.f32.mxu0 0.0
    %552 = vmatmul.mubr.f32.gmra.mrb[0].mxu0 %v482
    %v553 = vpop.f32.mrb[0].mxu0
    %v554 = vadd.f32 %v458, %v553
    %v555 = vpop.f32.mrb[0].mxu0
    %556 = vdwg.mxu0
    %v558 = vcombine.high %v554, %v554
    %v559 = vld [vmem:[%s1 + $0x30] sm:$0xff]
    %v560 = vld [vmem:[%s1 + $0x38] sm:$0xff]
    %v561 = vld [vmem:[%s1 + $0x40] sm:$0xff]
    %v562 = vlaneseq
    %v563 = vand.u32 %v562, 127
    %vm564 = vcmp.lt.s32.totalorder %v563, 0
    %v565 = vsub.s32 0, %v563
    %v566 = vsel %vm564, %v565, %v563
    %v567 = vmul.u32.u64.compose %v566, 2863311531
    %v568 = vextract.low.u32 %v567
    %v569 = vextract.high.u32 %v567
    %v570 = vshrl.u32 %v569, 4
    %v571 = vmul.u32 %v570, 24
    %v572 = vsub.s32 %v566, %v571
    %v573 = vsub.s32 0, %v572
    %v574 = vsel %vm564, %v573, %v572
    %vm575 = vcmp.ne.s32.totalorder %v574, 0
    %vm576 = vcmp.lt.s32.totalorder %v574, 0
    %vm577 = vmand %vm576, %vm575
    %v578 = vadd.s32 %v574, 24
    %v579 = vsel %vm577, %v578, %v574
    %vm580 = vcmp.lt.s32.totalorder %v579, 12
    %v581 = vsel %vm580, 1, 0
    %vm582 = vcmp.eq.s32.totalorder %v581, 1
    %v583 = vlaneseq
    %v584 = vshrl.u32 %v583, 7
    %v585 = vsub.s32 0, %v584
    %v586 = vrot.slane %v554, %v585
    %v587 = vlaneseq
    %v588 = vshrl.u32 %v587, 7
    %v589 = vsub.s32 0, %v588
    %v590 = vrot.slane %v558, %v589
    %v591 = vsel %vm467, %v590, %v586
    %v593 = vlaneseq
    %v594 = vshrl.u32 %v593, 7
    %v595 = vsub.s32 3, %v594
    %v596 = vrot.slane %v554, %v595
    %v597 = vlaneseq
    %v598 = vshrl.u32 %v597, 7
    %v599 = vsub.s32 3, %v598
    %v600 = vrot.slane %v558, %v599
    %v601 = vsel %vm467, %v600, %v596
    %v603 = vsel %vm582, %v591, %v601
    %vm604 = vcmask 195584
    %v606 = vsel %vm604, 0.0, 0
    %608 = vmatprep.subr.mxu0 0.0
    %609 = vmatpush1.msra.mxu0 %v559
    %610 = vmatprep.subr.mxu0 0.0
    %611 = vmatpush1.msra.mxu0 %v560
    %612 = vmatprep.subr.mxu0 0.0
    %613 = vmatpush1.msra.mxu0 %v561
    %614 = vmatprep.subr.mxu0 0.0
    %615 = vmatpush1.msra.mxu0 0.0
    %616 = vmatprep.subr.mxu0 0.0
    %617 = vmatpush1.msra.mxu0 0.0
    %618 = vmatprep.subr.mxu0 0.0
    %619 = vmatpush1.msra.mxu0 0.0
    %620 = vmatprep.subr.mxu0 0.0
    %621 = vmatpush1.msra.mxu0 0.0
    %622 = vmatprep.subr.mxu0 0.0
    %623 = vmatpush1.msra.mxu0 0.0
    %624 = vmatprep.subr.mxu0 0.0
    %625 = vmatpush1.msra.mxu0 0.0
    %626 = vmatprep.subr.mxu0 0.0
    %627 = vmatpush1.msra.mxu0 0.0
    %628 = vmatprep.subr.mxu0 0.0
    %629 = vmatpush1.msra.mxu0 0.0
    %630 = vmatprep.subr.mxu0 0.0
    %631 = vmatpush1.msra.mxu0 0.0
    %632 = vmatprep.subr.mxu0 0.0
    %633 = vmatpush1.msra.mxu0 0.0
    %634 = vmatprep.subr.mxu0 0.0
    %635 = vmatpush1.msra.mxu0 0.0
    %636 = vmatprep.subr.mxu0 0.0
    %637 = vmatpush1.msra.mxu0 0.0
    %638 = vmatprep.subr.mxu0 0.0
    %639 = vmatpush1.msra.mxu0 0.0
    %640 = vmatprep.subr.mxu0 0.0
    %641 = vmatpush1.msra.mxu0 0.0
    %642 = vmatprep.subr.mxu0 0.0
    %643 = vmatpush1.msra.mxu0 0.0
    %644 = vmatprep.subr.mxu0 0.0
    %645 = vmatpush1.msra.mxu0 0.0
    %646 = vmatprep.subr.mxu0 0.0
    %647 = vmatpush1.msra.mxu0 0.0
    %648 = vmatprep.subr.mxu0 0.0
    %649 = vmatpush1.msra.mxu0 0.0
    %650 = vmatprep.subr.mxu0 0.0
    %651 = vmatpush1.msra.mxu0 0.0
    %652 = vmatprep.subr.mxu0 0.0
    %653 = vmatpush1.msra.mxu0 0.0
    %654 = vmatprep.subr.mxu0 0.0
    %655 = vmatpush1.msra.mxu0 0.0
    %656 = vmatprep.subr.mxu0 0.0
    %657 = vmatpush1.msra.mxu0 0.0
    %658 = vmatprep.subr.mxu0 0.0
    %659 = vmatpush1.msra.mxu0 0.0
    %660 = vmatprep.subr.mxu0 0.0
    %661 = vmatpush1.msra.mxu0 0.0
    %662 = vmatprep.subr.mxu0 0.0
    %663 = vmatpush1.msra.mxu0 0.0
    %664 = vmatprep.subr.mxu0 0.0
    %665 = vmatpush1.msra.mxu0 0.0
    %666 = vmatprep.subr.mxu0 0.0
    %667 = vmatpush1.msra.mxu0 0.0
    %668 = vmatprep.subr.mxu0 0.0
    %669 = vmatpush1.msra.mxu0 0.0
    %670 = vmatprep.subr.mxu0 0.0
    %671 = vmatpush1.msra.mxu0 0.0
    %672 = vmatprep.mubr.f32.mxu0 0.0
    %673 = vmatmul.mubr.f32.gmra.mrb[0].mxu0 %v606
    %v674 = vpop.f32.mrb[0].mxu0
    %v675 = vadd.f32 %v603, %v674
    %v676 = vpop.f32.mrb[0].mxu0
    %677 = vdwg.mxu0
    %v678 = vsub.f32 0.0, %v675
    %v679 = vmul.f32 %v678, 1.442695
    %v680 = vpow.pop %v679
    %v681 = vadd.f32 %v680, 1.0
    %v682 = vrcp.pop %v681
    %v683 = vtanh.pop %v675
    %v684 = vmul.f32 %v682, 0.0
    %686 = vrot.lane.b32.xlu0 %v683, 80
    %v687 = vpop.permute.xlu0 %686
    %v689 = vmul.f32 %v682, %v687
    %691 = vrot.lane.b32.xlu0 %v689, 24
    %v692 = vpop.permute.xlu0 %691
    %v694 = vadd.f32 %v684, %v692
    %v695 = vtanh.pop %v694
    %697 = vrot.lane.b32.xlu0 %v695, 48
    %v698 = vpop.permute.xlu0 %697
    %v700 = vmul.f32 %v682, %v698
    %v701 = vlaneseq
    %v702 = vshrl.u32 %v701, 7
    %v703 = vsub.s32 1, %v702
    %v704 = vrot.slane %v554, %v703
    %v705 = vlaneseq
    %v706 = vshrl.u32 %v705, 7
    %v707 = vsub.s32 1, %v706
    %v708 = vrot.slane %v558, %v707
    %v709 = vsel %vm467, %v708, %v704
    %v711 = vlaneseq
    %v712 = vshrl.u32 %v711, 7
    %v713 = vsub.s32 2, %v712
    %v714 = vrot.slane %v554, %v713
    %v715 = vlaneseq
    %v716 = vshrl.u32 %v715, 7
    %v717 = vsub.s32 2, %v716
    %v718 = vrot.slane %v558, %v717
    %v719 = vsel %vm467, %v718, %v714
    %v721 = vsel %vm582, %v709, %v719
    %723 = vrot.lane.b32.xlu0 %v700, 56
    %v724 = vpop.permute.xlu0 %723
    %v725 = vsel %vm604, %v724, 0
    %727 = vmatprep.subr.mxu0 0.0
    %728 = vmatpush1.msra.mxu0 %v559
    %729 = vmatprep.subr.mxu0 0.0
    %730 = vmatpush1.msra.mxu0 %v560
    %731 = vmatprep.subr.mxu0 0.0
    %732 = vmatpush1.msra.mxu0 %v561
    %733 = vmatprep.subr.mxu0 0.0
    %734 = vmatpush1.msra.mxu0 0.0
    %735 = vmatprep.subr.mxu0 0.0
    %736 = vmatpush1.msra.mxu0 0.0
    %737 = vmatprep.subr.mxu0 0.0
    %738 = vmatpush1.msra.mxu0 0.0
    %739 = vmatprep.subr.mxu0 0.0
    %740 = vmatpush1.msra.mxu0 0.0
    %741 = vmatprep.subr.mxu0 0.0
    %742 = vmatpush1.msra.mxu0 0.0
    %743 = vmatprep.subr.mxu0 0.0
    %744 = vmatpush1.msra.mxu0 0.0
    %745 = vmatprep.subr.mxu0 0.0
    %746 = vmatpush1.msra.mxu0 0.0
    %747 = vmatprep.subr.mxu0 0.0
    %748 = vmatpush1.msra.mxu0 0.0
    %749 = vmatprep.subr.mxu0 0.0
    %750 = vmatpush1.msra.mxu0 0.0
    %751 = vmatprep.subr.mxu0 0.0
    %752 = vmatpush1.msra.mxu0 0.0
    %753 = vmatprep.subr.mxu0 0.0
    %754 = vmatpush1.msra.mxu0 0.0
    %755 = vmatprep.subr.mxu0 0.0
    %756 = vmatpush1.msra.mxu0 0.0
    %757 = vmatprep.subr.mxu0 0.0
    %758 = vmatpush1.msra.mxu0 0.0
    %759 = vmatprep.subr.mxu0 0.0
    %760 = vmatpush1.msra.mxu0 0.0
    %761 = vmatprep.subr.mxu0 0.0
    %762 = vmatpush1.msra.mxu0 0.0
    %763 = vmatprep.subr.mxu0 0.0
    %764 = vmatpush1.msra.mxu0 0.0
    %765 = vmatprep.subr.mxu0 0.0
    %766 = vmatpush1.msra.mxu0 0.0
    %767 = vmatprep.subr.mxu0 0.0
    %768 = vmatpush1.msra.mxu0 0.0
    %769 = vmatprep.subr.mxu0 0.0
    %770 = vmatpush1.msra.mxu0 0.0
    %771 = vmatprep.subr.mxu0 0.0
    %772 = vmatpush1.msra.mxu0 0.0
    %773 = vmatprep.subr.mxu0 0.0
    %774 = vmatpush1.msra.mxu0 0.0
    %775 = vmatprep.subr.mxu0 0.0
    %776 = vmatpush1.msra.mxu0 0.0
    %777 = vmatprep.subr.mxu0 0.0
    %778 = vmatpush1.msra.mxu0 0.0
    %779 = vmatprep.subr.mxu0 0.0
    %780 = vmatpush1.msra.mxu0 0.0
    %781 = vmatprep.subr.mxu0 0.0
    %782 = vmatpush1.msra.mxu0 0.0
    %783 = vmatprep.subr.mxu0 0.0
    %784 = vmatpush1.msra.mxu0 0.0
    %785 = vmatprep.subr.mxu0 0.0
    %786 = vmatpush1.msra.mxu0 0.0
    %787 = vmatprep.subr.mxu0 0.0
    %788 = vmatpush1.msra.mxu0 0.0
    %789 = vmatprep.subr.mxu0 0.0
    %790 = vmatpush1.msra.mxu0 0.0
    %791 = vmatprep.mubr.f32.mxu0 0.0
    %792 = vmatmul.mubr.f32.gmra.mrb[0].mxu0 %v725
    %v793 = vpop.f32.mrb[0].mxu0
    %v794 = vadd.f32 %v721, %v793
    %v795 = vpop.f32.mrb[0].mxu0
    %796 = vdwg.mxu0
    %v797 = vsub.f32 0.0, %v794
    %v798 = vmul.f32 %v797, 1.442695
    %v799 = vpow.pop %v798
    %v800 = vadd.f32 %v799, 1.0
    %v801 = vrcp.pop %v800
    %v802 = vtanh.pop %v794
    %v803 = vmul.f32 %v801, %v694
    %805 = vrot.lane.b32.xlu0 %v802, 80
    %v806 = vpop.permute.xlu0 %805
    %v808 = vmul.f32 %v801, %v806
    %810 = vrot.lane.b32.xlu0 %v808, 24
    %v811 = vpop.permute.xlu0 %810
    %v813 = vadd.f32 %v803, %v811
    %v814 = vtanh.pop %v813
    %816 = vrot.lane.b32.xlu0 %v814, 48
    %v817 = vpop.permute.xlu0 %816
    %v819 = vmul.f32 %v801, %v817
    %v820 = vsel %vm582, %v719, %v709
    %822 = vrot.lane.b32.xlu0 %v819, 56
    %v823 = vpop.permute.xlu0 %822
    %v824 = vsel %vm604, %v823, 0
    %826 = vmatprep.subr.mxu0 0.0
    %827 = vmatpush1.msra.mxu0 %v559
    %828 = vmatprep.subr.mxu0 0.0
    %829 = vmatpush1.msra.mxu0 %v560
    %830 = vmatprep.subr.mxu0 0.0
    %831 = vmatpush1.msra.mxu0 %v561
    %832 = vmatprep.subr.mxu0 0.0
    %833 = vmatpush1.msra.mxu0 0.0
    %834 = vmatprep.subr.mxu0 0.0
    %835 = vmatpush1.msra.mxu0 0.0
    %836 = vmatprep.subr.mxu0 0.0
    %837 = vmatpush1.msra.mxu0 0.0
    %838 = vmatprep.subr.mxu0 0.0
    %839 = vmatpush1.msra.mxu0 0.0
    %840 = vmatprep.subr.mxu0 0.0
    %841 = vmatpush1.msra.mxu0 0.0
    %842 = vmatprep.subr.mxu0 0.0
    %843 = vmatpush1.msra.mxu0 0.0
    %844 = vmatprep.subr.mxu0 0.0
    %845 = vmatpush1.msra.mxu0 0.0
    %846 = vmatprep.subr.mxu0 0.0
    %847 = vmatpush1.msra.mxu0 0.0
    %848 = vmatprep.subr.mxu0 0.0
    %849 = vmatpush1.msra.mxu0 0.0
    %850 = vmatprep.subr.mxu0 0.0
    %851 = vmatpush1.msra.mxu0 0.0
    %852 = vmatprep.subr.mxu0 0.0
    %853 = vmatpush1.msra.mxu0 0.0
    %854 = vmatprep.subr.mxu0 0.0
    %855 = vmatpush1.msra.mxu0 0.0
    %856 = vmatprep.subr.mxu0 0.0
    %857 = vmatpush1.msra.mxu0 0.0
    %858 = vmatprep.subr.mxu0 0.0
    %859 = vmatpush1.msra.mxu0 0.0
    %860 = vmatprep.subr.mxu0 0.0
    %861 = vmatpush1.msra.mxu0 0.0
    %862 = vmatprep.subr.mxu0 0.0
    %863 = vmatpush1.msra.mxu0 0.0
    %864 = vmatprep.subr.mxu0 0.0
    %865 = vmatpush1.msra.mxu0 0.0
    %866 = vmatprep.subr.mxu0 0.0
    %867 = vmatpush1.msra.mxu0 0.0
    %868 = vmatprep.subr.mxu0 0.0
    %869 = vmatpush1.msra.mxu0 0.0
    %870 = vmatprep.subr.mxu0 0.0
    %871 = vmatpush1.msra.mxu0 0.0
    %872 = vmatprep.subr.mxu0 0.0
    %873 = vmatpush1.msra.mxu0 0.0
    %874 = vmatprep.subr.mxu0 0.0
    %875 = vmatpush1.msra.mxu0 0.0
    %876 = vmatprep.subr.mxu0 0.0
    %877 = vmatpush1.msra.mxu0 0.0
    %878 = vmatprep.subr.mxu0 0.0
    %879 = vmatpush1.msra.mxu0 0.0
    %880 = vmatprep.subr.mxu0 0.0
    %881 = vmatpush1.msra.mxu0 0.0
    %882 = vmatprep.subr.mxu0 0.0
    %883 = vmatpush1.msra.mxu0 0.0
    %884 = vmatprep.subr.mxu0 0.0
    %885 = vmatpush1.msra.mxu0 0.0
    %886 = vmatprep.subr.mxu0 0.0
    %887 = vmatpush1.msra.mxu0 0.0
    %888 = vmatprep.subr.mxu0 0.0
    %889 = vmatpush1.msra.mxu0 0.0
    %890 = vmatprep.mubr.f32.mxu0 0.0
    %891 = vmatmul.mubr.f32.gmra.mrb[0].mxu0 %v824
    %v892 = vpop.f32.mrb[0].mxu0
    %v893 = vadd.f32 %v820, %v892
    %v894 = vpop.f32.mrb[0].mxu0
    %895 = vdwg.mxu0
    %v896 = vsub.f32 0.0, %v893
    %v897 = vmul.f32 %v896, 1.442695
    %v898 = vpow.pop %v897
    %v899 = vadd.f32 %v898, 1.0
    %v900 = vrcp.pop %v899
    %v901 = vtanh.pop %v893
    %v902 = vmul.f32 %v900, %v813
    %904 = vrot.lane.b32.xlu0 %v901, 80
    %v905 = vpop.permute.xlu0 %904
    %v907 = vmul.f32 %v900, %v905
    %909 = vrot.lane.b32.xlu0 %v907, 24
    %v910 = vpop.permute.xlu0 %909
    %v912 = vadd.f32 %v902, %v910
    %v913 = vtanh.pop %v912
    %915 = vrot.lane.b32.xlu0 %v913, 48
    %v916 = vpop.permute.xlu0 %915
    %v918 = vmul.f32 %v900, %v916
    %v919 = vsel %vm582, %v601, %v591
    %921 = vrot.lane.b32.xlu0 %v918, 56
    %v922 = vpop.permute.xlu0 %921
    %v923 = vsel %vm604, %v922, 0
    %925 = vmatprep.subr.mxu0 0.0
    %926 = vmatpush1.msra.mxu0 %v559
    %927 = vmatprep.subr.mxu0 0.0
    %928 = vmatpush1.msra.mxu0 %v560
    %929 = vmatprep.subr.mxu0 0.0
    %930 = vmatpush1.msra.mxu0 %v561
    %931 = vmatprep.subr.mxu0 0.0
    %932 = vmatpush1.msra.mxu0 0.0
    %933 = vmatprep.subr.mxu0 0.0
    %934 = vmatpush1.msra.mxu0 0.0
    %935 = vmatprep.subr.mxu0 0.0
    %936 = vmatpush1.msra.mxu0 0.0
    %937 = vmatprep.subr.mxu0 0.0
    %938 = vmatpush1.msra.mxu0 0.0
    %939 = vmatprep.subr.mxu0 0.0
    %940 = vmatpush1.msra.mxu0 0.0
    %941 = vmatprep.subr.mxu0 0.0
    %942 = vmatpush1.msra.mxu0 0.0
    %943 = vmatprep.subr.mxu0 0.0
    %944 = vmatpush1.msra.mxu0 0.0
    %945 = vmatprep.subr.mxu0 0.0
    %946 = vmatpush1.msra.mxu0 0.0
    %947 = vmatprep.subr.mxu0 0.0
    %948 = vmatpush1.msra.mxu0 0.0
    %949 = vmatprep.subr.mxu0 0.0
    %950 = vmatpush1.msra.mxu0 0.0
    %951 = vmatprep.subr.mxu0 0.0
    %952 = vmatpush1.msra.mxu0 0.0
    %953 = vmatprep.subr.mxu0 0.0
    %954 = vmatpush1.msra.mxu0 0.0
    %955 = vmatprep.subr.mxu0 0.0
    %956 = vmatpush1.msra.mxu0 0.0
    %957 = vmatprep.subr.mxu0 0.0
    %958 = vmatpush1.msra.mxu0 0.0
    %959 = vmatprep.subr.mxu0 0.0
    %960 = vmatpush1.msra.mxu0 0.0
    %961 = vmatprep.subr.mxu0 0.0
    %962 = vmatpush1.msra.mxu0 0.0
    %963 = vmatprep.subr.mxu0 0.0
    %964 = vmatpush1.msra.mxu0 0.0
    %965 = vmatprep.subr.mxu0 0.0
    %966 = vmatpush1.msra.mxu0 0.0
    %967 = vmatprep.subr.mxu0 0.0
    %968 = vmatpush1.msra.mxu0 0.0
    %969 = vmatprep.subr.mxu0 0.0
    %970 = vmatpush1.msra.mxu0 0.0
    %971 = vmatprep.subr.mxu0 0.0
    %972 = vmatpush1.msra.mxu0 0.0
    %973 = vmatprep.subr.mxu0 0.0
    %974 = vmatpush1.msra.mxu0 0.0
    %975 = vmatprep.subr.mxu0 0.0
    %976 = vmatpush1.msra.mxu0 0.0
    %977 = vmatprep.subr.mxu0 0.0
    %978 = vmatpush1.msra.mxu0 0.0
    %979 = vmatprep.subr.mxu0 0.0
    %980 = vmatpush1.msra.mxu0 0.0
    %981 = vmatprep.subr.mxu0 0.0
    %982 = vmatpush1.msra.mxu0 0.0
    %983 = vmatprep.subr.mxu0 0.0
    %984 = vmatpush1.msra.mxu0 0.0
    %985 = vmatprep.subr.mxu0 0.0
    %986 = vmatpush1.msra.mxu0 0.0
    %987 = vmatprep.subr.mxu0 0.0
    %988 = vmatpush1.msra.mxu0 0.0
    %989 = vmatprep.mubr.f32.mxu0 0.0
    %990 = vmatmul.mubr.f32.gmra.mrb[0].mxu0 %v923
    %v991 = vpop.f32.mrb[0].mxu0
    %v992 = vadd.f32 %v919, %v991
    %v993 = vpop.f32.mrb[0].mxu0
    %994 = vdwg.mxu0
    %v995 = vsub.f32 0.0, %v992
    %v996 = vmul.f32 %v995, 1.442695
    %v997 = vpow.pop %v996
    %v998 = vadd.f32 %v997, 1.0
    %v999 = vrcp.pop %v998
    %v1000 = vtanh.pop %v992
    %v1001 = vmul.f32 %v999, %v912
    %1003 = vrot.lane.b32.xlu0 %v1000, 80
    %v1004 = vpop.permute.xlu0 %1003
    %v1006 = vmul.f32 %v999, %v1004
    %1008 = vrot.lane.b32.xlu0 %v1006, 24
    %v1009 = vpop.permute.xlu0 %1008
    %v1011 = vadd.f32 %v1001, %v1009
    %v1012 = vtanh.pop %v1011
    %1014 = vrot.lane.b32.xlu0 %v1012, 48
    %v1015 = vpop.permute.xlu0 %1014
    %v1017 = vmul.f32 %v999, %v1015
    %1020 = vrot.lane.b32.xlu0 %v1017, 56
    %v1021 = vpop.permute.xlu0 %1020
    %1023 = vrot.lane.b32.xlu0 %v819, 80
    %v1024 = vpop.permute.xlu0 %1023
    %1026 = vrot.lane.b32.xlu0 %v918, 80
    %v1027 = vpop.permute.xlu0 %1026
    %1029 = vrot.lane.b32.xlu0 %v918, 104
    %v1030 = vpop.permute.xlu0 %1029
    %1032 = vrot.lane.b32.xlu0 %v819, 104
    %v1033 = vpop.permute.xlu0 %1032
    %v1035 = vsel %vm481, %v724, %v1021
    %v1036 = vsel %vm604, %v1035, %v1024
    %vm1037 = vcmask 293888
    %v1038 = vsel %vm1037, %v1036, %v1027
    %vm1039 = vcmask 392192
    %v1040 = vsel %vm1039, %v1038, %v1030
    %vm1041 = vcmask 490496
    %v1042 = vsel %vm1041, %v1040, %v1033
    %vm1043 = vcmask 588800
    %v1044 = vsel %vm1043, %v1042, %v1017
    %vm1045 = vcmask 687104
    %v1046 = vsel %vm1045, %v1044, %v700
    %v1047 = vld [vmem:[%s1 + $0x48] sm:$0xff]
    %v1048 = vld [vmem:[%s1 + $0x50] sm:$0xff]
    %v1049 = vld [vmem:[%s1 + $0x58] sm:$0xff]
    %v1050 = vld [vmem:[%s1 + $0x60] sm:$0xff]
    %v1051 = vld [vmem:[%s1 + $0x68] sm:$0xff]
    %v1052 = vld [vmem:[%s1 + $0x70] sm:$0xff]
    %v1053 = vld [vmem:[%s1 + $0x78] sm:$0xff]
    %v1054 = vld [vmem:[%s1 + $0x80] sm:$0xff]
    %v1055 = vld [vmem:[%s1 + $0x88] sm:$0xff]
    %v1056 = vld [vmem:[%s1 + $0x90] sm:$0xff]
    %v1057 = vld [vmem:[%s1 + $0x98] sm:$0xff]
    %v1058 = vld [vmem:[%s1 + $0xa0] sm:$0xff]
    %v1059 = vld [vmem:[%s1 + $0xda] sm:$0x1]
    %v1060 = vlaneseq
    %v1061 = vshrl.u32 %v1060, 7
    %v1062 = vsub.s32 0, %v1061
    %v1063 = vrot.slane %v1059, %v1062
    %vm1064 = vcmask 785408
    %v1066 = vsel %vm1064, %v1046, 0
    %1068 = vmatprep.subr.mxu0 0.0
    %1069 = vmatpush1.msra.mxu0 %v1047
    %1070 = vmatprep.subr.mxu0 0.0
    %1071 = vmatpush1.msra.mxu0 %v1048
    %1072 = vmatprep.subr.mxu0 0.0
    %1073 = vmatpush1.msra.mxu0 %v1049
    %1074 = vmatprep.subr.mxu0 0.0
    %1075 = vmatpush1.msra.mxu0 %v1050
    %1076 = vmatprep.subr.mxu0 0.0
    %1077 = vmatpush1.msra.mxu0 %v1051
    %1078 = vmatprep.subr.mxu0 0.0
    %1079 = vmatpush1.msra.mxu0 %v1052
    %1080 = vmatprep.subr.mxu0 0.0
    %1081 = vmatpush1.msra.mxu0 %v1053
    %1082 = vmatprep.subr.mxu0 0.0
    %1083 = vmatpush1.msra.mxu0 %v1054
    %1084 = vmatprep.subr.mxu0 0.0
    %1085 = vmatpush1.msra.mxu0 %v1055
    %1086 = vmatprep.subr.mxu0 0.0
    %1087 = vmatpush1.msra.mxu0 %v1056
    %1088 = vmatprep.subr.mxu0 0.0
    %1089 = vmatpush1.msra.mxu0 %v1057
    %1090 = vmatprep.subr.mxu0 0.0
    %1091 = vmatpush1.msra.mxu0 %v1058
    %1092 = vmatprep.subr.mxu0 0.0
    %1093 = vmatpush1.msra.mxu0 0.0
    %1094 = vmatprep.subr.mxu0 0.0
    %1095 = vmatpush1.msra.mxu0 0.0
    %1096 = vmatprep.subr.mxu0 0.0
    %1097 = vmatpush1.msra.mxu0 0.0
    %1098 = vmatprep.subr.mxu0 0.0
    %1099 = vmatpush1.msra.mxu0 0.0
    %1100 = vmatprep.subr.mxu0 0.0
    %1101 = vmatpush1.msra.mxu0 0.0
    %1102 = vmatprep.subr.mxu0 0.0
    %1103 = vmatpush1.msra.mxu0 0.0
    %1104 = vmatprep.subr.mxu0 0.0
    %1105 = vmatpush1.msra.mxu0 0.0
    %1106 = vmatprep.subr.mxu0 0.0
    %1107 = vmatpush1.msra.mxu0 0.0
    %1108 = vmatprep.subr.mxu0 0.0
    %1109 = vmatpush1.msra.mxu0 0.0
    %1110 = vmatprep.subr.mxu0 0.0
    %1111 = vmatpush1.msra.mxu0 0.0
    %1112 = vmatprep.subr.mxu0 0.0
    %1113 = vmatpush1.msra.mxu0 0.0
    %1114 = vmatprep.subr.mxu0 0.0
    %1115 = vmatpush1.msra.mxu0 0.0
    %1116 = vmatprep.subr.mxu0 0.0
    %1117 = vmatpush1.msra.mxu0 0.0
    %1118 = vmatprep.subr.mxu0 0.0
    %1119 = vmatpush1.msra.mxu0 0.0
    %1120 = vmatprep.subr.mxu0 0.0
    %1121 = vmatpush1.msra.mxu0 0.0
    %1122 = vmatprep.subr.mxu0 0.0
    %1123 = vmatpush1.msra.mxu0 0.0
    %1124 = vmatprep.subr.mxu0 0.0
    %1125 = vmatpush1.msra.mxu0 0.0
    %1126 = vmatprep.subr.mxu0 0.0
    %1127 = vmatpush1.msra.mxu0 0.0
    %1128 = vmatprep.subr.mxu0 0.0
    %1129 = vmatpush1.msra.mxu0 0.0
    %1130 = vmatprep.subr.mxu0 0.0
    %1131 = vmatpush1.msra.mxu0 0.0
    %1132 = vmatprep.mubr.f32.mxu0 0.0
    %1133 = vmatmul.mubr.f32.gmra.mrb[0].mxu0 %v1066
    %v1134 = vpop.f32.mrb[0].mxu0
    %v1135 = vadd.f32 %v1063, %v1134
    %v1136 = vpop.f32.mrb[0].mxu0
    %1137 = vdwg.mxu0
    %v1138 = vmax.f32 %v1135, 0.0
    %v1139 = vld [vmem:[%s1 + $0xa8] sm:$0xff]
    %v1140 = vld [vmem:[%s1 + $0xb0] sm:$0xff]
    %v1141 = vld [vmem:[%s1 + $0xb8] sm:$0xff]
    %v1142 = vld [vmem:[%s1 + $0xc0] sm:$0xff]
    %v1143 = vld [vmem:[%s1 + $0xc8] sm:$0xff]
    %v1144 = vld [vmem:[%s1 + $0xd0] sm:$0xff]
    %v1145 = vld [vmem:[%s1 + $0xdb] sm:$0x1]
    %v1146 = vlaneseq
    %v1147 = vshrl.u32 %v1146, 7
    %v1148 = vsub.s32 0, %v1147
    %v1149 = vrot.slane %v1145, %v1148
    %v1151 = vsel %vm1039, %v1138, 0
    %1153 = vmatprep.subr.mxu0 0.0
    %1154 = vmatpush1.msra.mxu0 %v1139
    %1155 = vmatprep.subr.mxu0 0.0
    %1156 = vmatpush1.msra.mxu0 %v1140
    %1157 = vmatprep.subr.mxu0 0.0
    %1158 = vmatpush1.msra.mxu0 %v1141
    %1159 = vmatprep.subr.mxu0 0.0
    %1160 = vmatpush1.msra.mxu0 %v1142
    %1161 = vmatprep.subr.mxu0 0.0
    %1162 = vmatpush1.msra.mxu0 %v1143
    %1163 = vmatprep.subr.mxu0 0.0
    %1164 = vmatpush1.msra.mxu0 %v1144
    %1165 = vmatprep.subr.mxu0 0.0
    %1166 = vmatpush1.msra.mxu0 0.0
    %1167 = vmatprep.subr.mxu0 0.0
    %1168 = vmatpush1.msra.mxu0 0.0
    %1169 = vmatprep.subr.mxu0 0.0
    %1170 = vmatpush1.msra.mxu0 0.0
    %1171 = vmatprep.subr.mxu0 0.0
    %1172 = vmatpush1.msra.mxu0 0.0
    %1173 = vmatprep.subr.mxu0 0.0
    %1174 = vmatpush1.msra.mxu0 0.0
    %1175 = vmatprep.subr.mxu0 0.0
    %1176 = vmatpush1.msra.mxu0 0.0
    %1177 = vmatprep.subr.mxu0 0.0
    %1178 = vmatpush1.msra.mxu0 0.0
    %1179 = vmatprep.subr.mxu0 0.0
    %1180 = vmatpush1.msra.mxu0 0.0
    %1181 = vmatprep.subr.mxu0 0.0
    %1182 = vmatpush1.msra.mxu0 0.0
    %1183 = vmatprep.subr.mxu0 0.0
    %1184 = vmatpush1.msra.mxu0 0.0
    %1185 = vmatprep.subr.mxu0 0.0
    %1186 = vmatpush1.msra.mxu0 0.0
    %1187 = vmatprep.subr.mxu0 0.0
    %1188 = vmatpush1.msra.mxu0 0.0
    %1189 = vmatprep.subr.mxu0 0.0
    %1190 = vmatpush1.msra.mxu0 0.0
    %1191 = vmatprep.subr.mxu0 0.0
    %1192 = vmatpush1.msra.mxu0 0.0
    %1193 = vmatprep.subr.mxu0 0.0
    %1194 = vmatpush1.msra.mxu0 0.0
    %1195 = vmatprep.subr.mxu0 0.0
    %1196 = vmatpush1.msra.mxu0 0.0
    %1197 = vmatprep.subr.mxu0 0.0
    %1198 = vmatpush1.msra.mxu0 0.0
    %1199 = vmatprep.subr.mxu0 0.0
    %1200 = vmatpush1.msra.mxu0 0.0
    %1201 = vmatprep.subr.mxu0 0.0
    %1202 = vmatpush1.msra.mxu0 0.0
    %1203 = vmatprep.subr.mxu0 0.0
    %1204 = vmatpush1.msra.mxu0 0.0
    %1205 = vmatprep.subr.mxu0 0.0
    %1206 = vmatpush1.msra.mxu0 0.0
    %1207 = vmatprep.subr.mxu0 0.0
    %1208 = vmatpush1.msra.mxu0 0.0
    %1209 = vmatprep.subr.mxu0 0.0
    %1210 = vmatpush1.msra.mxu0 0.0
    %1211 = vmatprep.subr.mxu0 0.0
    %1212 = vmatpush1.msra.mxu0 0.0
    %1213 = vmatprep.subr.mxu0 0.0
    %1214 = vmatpush1.msra.mxu0 0.0
    %1215 = vmatprep.subr.mxu0 0.0
    %1216 = vmatpush1.msra.mxu0 0.0
    %1217 = vmatprep.mubr.f32.mxu0 0.0
    %1218 = vmatmul.mubr.f32.gmra.mrb[0].mxu0 %v1151
    %v1219 = vpop.f32.mrb[0].mxu0
    %v1220 = vadd.f32 %v1149, %v1219
    %v1221 = vpop.f32.mrb[0].mxu0
    %1222 = vdwg.mxu0
    %v1223 = vsub.f32 0.0, %v1220
    %v1224 = vmul.f32 %v1223, 1.442695
    %v1225 = vpow.pop %v1224
    %v1226 = vadd.f32 %v1225, 1.0
    %v1227 = vrcp.pop %v1226
    %v1228 = vmul.f32 1.0, %v1227
    %v1229 = vsub.f32 1.0, %v1228
    %1231 = vrot.lane.b32.xlu0 %v1228, 1
    %v1232 = vpop.permute.xlu0 %1231
    %vm1234 = vcmask 7168
    %v1235 = vsel %vm1234, %v1229, %v1232
    %vm1236 = vcmask 9216
    %1237 = vst.msk [vmem:[#allocation2] sm:$0x3] %vm1236, %v1235
    // Predicated region
    $region10: #{deepromoter_forward.1} parent=1 // pred_check
      _
    $region11: #{deepromoter_forward.1} parent=1 // pred_check_branch
      %1239 = sbr.rel (0) target = $region13
    $region12: #{deepromoter_forward.1} parent=1 // pred_region
      %s1241 = ssub.s32 32, 32
      %1242 = vsyncadd [#allocation3], %s1241
      %s1244 = sshll.u32 [#allocation2], 4
      %s1245 = int_to_ptr.vmem [resolvable:$true] %s1244
      %1247 = dma.vmem_to_hbm [thread:$0]  %s1245, 32, %s2, [#allocation3]
    $region13: #{deepromoter_forward.1} parent=1 // pred_fallthru
      _
    // Predicated region
    $region14: #{deepromoter_forward.1} parent=1 // pred_check
      _
    $region15: #{deepromoter_forward.1} parent=1 // pred_check_branch
      %1249 = sbr.rel (0) target = $region17
    $region16: #{deepromoter_forward.1} parent=1 // pred_region
      %1250 = dma.done [#allocation3], 32
    $region17: #{deepromoter_forward.1} parent=1 // pred_fallthru
      _
    %1251 = vsyncpa [#allocation3], 1

</llo_original>
